<compile_context>
chip_gen: v7x
topology: tpu7x:2x2x1
jax: 0.10.0
libtpu: 0.0.40
codegen_flags: <defaults>
</compile_context>

<pallas_src>
import functools
import math

import jax
import jax.numpy as jnp
from jax.experimental import pallas as pl
from jax.experimental.pallas import tpu as pltpu


# ----------------------------------------------------------------------------
# Fused kernel: projections + per-head attention + fc + residual + LayerNorm
# ----------------------------------------------------------------------------
def _mha_fused_kernel(q_ref, k_ref, v_ref,
                      wq_ref, bq_ref, wk_ref, bk_ref, wv_ref, bv_ref,
                      wfc_ref, bfc_ref, gamma_ref, beta_ref,
                      o_ref, attn_ref,
                      *, n_head, d_k, d_v, inv_temperature, ln_eps):
    x_q = q_ref[...]          # (len_q, d_model)  -- also the residual
    x_k = k_ref[...]          # (len_k, d_model)
    x_v = v_ref[...]          # (len_v, d_model)

    # --- Q/K/V projections: weights pre-transposed -> plain MXU matmuls -----
    qp = jnp.dot(x_q, wq_ref[...], preferred_element_type=jnp.float32) + bq_ref[...]
    kp = jnp.dot(x_k, wk_ref[...], preferred_element_type=jnp.float32) + bk_ref[...]
    vp = jnp.dot(x_v, wv_ref[...], preferred_element_type=jnp.float32) + bv_ref[...]

    # Fold 1/temperature into q (cheaper than scaling the [len_q, len_k] scores).
    qp = qp * inv_temperature

    # --- per-head scaled dot-product attention (static unroll over heads) ---
    head_outs = []
    for h in range(n_head):
        q_h = qp[:, h * d_k:(h + 1) * d_k]          # (len_q, d_k) static lane slice
        k_h = kp[:, h * d_k:(h + 1) * d_k]          # (len_k, d_k)
        v_h = vp[:, h * d_v:(h + 1) * d_v]          # (len_v, d_v)

        # contract on d_k directly (no in-kernel transpose of k_h)
        s = jax.lax.dot_general(q_h, k_h, (((1,), (1,)), ((), ())),
                                preferred_element_type=jnp.float32)  # (len_q, len_k)
        m = jnp.max(s, axis=-1, keepdims=True)
        e = jnp.exp(s - m)
        denom = jnp.sum(e, axis=-1, keepdims=True)
        p = e * pl.reciprocal(denom, approx=False)   # softmax over keys (dim=2)
        attn_ref[h] = p
        head_outs.append(jnp.dot(p, v_h, preferred_element_type=jnp.float32))

    # heads packed on the lane axis -> (len_q, n_head*d_v): lane-dense store /
    # fc input, and no post-attention permute in HBM.
    attn_out = jnp.concatenate(head_outs, axis=-1)

    # --- fc + (dropout = identity) + residual + LayerNorm, all fused --------
    y = jnp.dot(attn_out, wfc_ref[...], preferred_element_type=jnp.float32) + bfc_ref[...]
    y = y + x_q
    mean = jnp.mean(y, axis=-1, keepdims=True)
    var = jnp.mean(jnp.square(y - mean), axis=-1, keepdims=True)
    y_hat = (y - mean) * jax.lax.rsqrt(var + ln_eps)
    o_ref[...] = y_hat * gamma_ref[...] + beta_ref[...]


# ----------------------------------------------------------------------------
# Wrapper: one pallas_call, grid over batch, weights resident in VMEM
# ----------------------------------------------------------------------------
def multi_head_attention(params, q, k, v, n_head, d_k, d_v):
    sz_b, len_q, d_model = q.shape
    _, len_k, _ = k.shape
    _, len_v, _ = v.shape

    # One-time weight transposes OUTSIDE the kernel ([in, out] layout) so the
    # kernel never transposes a weight tile.
    wq_t = params["w_qs"].T            # (d_model, n_head*d_k)
    wk_t = params["w_ks"].T            # (d_model, n_head*d_k)
    wv_t = params["w_vs"].T            # (d_model, n_head*d_v)
    wfc_t = params["w_fc"].T           # (n_head*d_v, d_model)

    bq = params["b_qs"].reshape(1, n_head * d_k)
    bk = params["b_ks"].reshape(1, n_head * d_k)
    bv = params["b_vs"].reshape(1, n_head * d_v)
    bfc = params["b_fc"].reshape(1, d_model)
    gamma = params["ln_gamma"].reshape(1, d_model)
    beta = params["ln_beta"].reshape(1, d_model)

    kernel = functools.partial(
        _mha_fused_kernel,
        n_head=n_head, d_k=d_k, d_v=d_v,
        inv_temperature=1.0 / math.sqrt(d_k), ln_eps=1e-5)

    const2 = lambda b: (0, 0)   # resident weight / bias / LN-param blocks

    out, attn = pl.pallas_call(
        kernel,
        out_shape=(
            jax.ShapeDtypeStruct((sz_b, len_q, d_model), jnp.float32),
            jax.ShapeDtypeStruct((n_head, sz_b, len_q, len_k), jnp.float32),
        ),
        grid_spec=pl.GridSpec(
            grid=(sz_b,),
            in_specs=[
                # activations: one batch element per step, batch dim squeezed
                pl.BlockSpec((None, len_q, d_model), lambda b: (b, 0, 0)),
                pl.BlockSpec((None, len_k, d_model), lambda b: (b, 0, 0)),
                pl.BlockSpec((None, len_v, d_model), lambda b: (b, 0, 0)),
                # weights / biases: constant index_map -> fetched once, resident
                pl.BlockSpec((d_model, n_head * d_k), const2),
                pl.BlockSpec((1, n_head * d_k), const2),
                pl.BlockSpec((d_model, n_head * d_k), const2),
                pl.BlockSpec((1, n_head * d_k), const2),
                pl.BlockSpec((d_model, n_head * d_v), const2),
                pl.BlockSpec((1, n_head * d_v), const2),
                pl.BlockSpec((n_head * d_v, d_model), const2),
                pl.BlockSpec((1, d_model), const2),
                pl.BlockSpec((1, d_model), const2),
                pl.BlockSpec((1, d_model), const2),
            ],
            out_specs=(
                pl.BlockSpec((None, len_q, d_model), lambda b: (b, 0, 0)),
                pl.BlockSpec((n_head, None, len_q, len_k), lambda b: (0, b, 0, 0)),
            ),
        ),
        compiler_params=pltpu.CompilerParams(
            dimension_semantics=("parallel",)),
    )(q, k, v, wq_t, bq, wk_t, bk, wv_t, bv, wfc_t, bfc, gamma, beta)

    # [n_head, sz_b, len_q, len_k] -> [n_head*sz_b, len_q, len_k] is a free view
    # and matches the PyTorch head-major attn layout exactly.
    return out, attn.reshape(n_head * sz_b, len_q, len_k)


# ----------------------------------------------------------------------------
# Deterministic parameter init (shapes from the module's __init__)
# ----------------------------------------------------------------------------
def init_params(key, d_model, n_head, d_k, d_v):
    ks = jax.random.split(key, 8)
    std_qk = math.sqrt(2.0 / (d_model + d_k))
    std_v = math.sqrt(2.0 / (d_model + d_v))
    std_fc = math.sqrt(2.0 / (n_head * d_v + d_model))  # xavier_normal
    bnd = 1.0 / math.sqrt(d_model)
    bnd_fc = 1.0 / math.sqrt(n_head * d_v)
    return {
        "w_qs": std_qk * jax.random.normal(ks[0], (n_head * d_k, d_model), jnp.float32),
        "b_qs": jax.random.uniform(ks[1], (n_head * d_k,), jnp.float32, -bnd, bnd),
        "w_ks": std_qk * jax.random.normal(ks[2], (n_head * d_k, d_model), jnp.float32),
        "b_ks": jax.random.uniform(ks[3], (n_head * d_k,), jnp.float32, -bnd, bnd),
        "w_vs": std_v * jax.random.normal(ks[4], (n_head * d_v, d_model), jnp.float32),
        "b_vs": jax.random.uniform(ks[5], (n_head * d_v,), jnp.float32, -bnd, bnd),
        "w_fc": std_fc * jax.random.normal(ks[6], (d_model, n_head * d_v), jnp.float32),
        "b_fc": jax.random.uniform(ks[7], (d_model,), jnp.float32, -bnd_fc, bnd_fc),
        "ln_gamma": jnp.ones((d_model,), jnp.float32),
        "ln_beta": jnp.zeros((d_model,), jnp.float32),
    }


if __name__ == "__main__":
    # Small hparams: d_model=32, n_head=4, d_k=d_v=8, batch=2, seq=8
    sz_b, seq_len, d_model = 2, 8, 32
    n_head, d_k, d_v = 4, 8, 8

    key = jax.random.PRNGKey(0)
    k_param, k_q, k_k, k_v = jax.random.split(key, 4)
    params = init_params(k_param, d_model, n_head, d_k, d_v)

    q = jax.random.normal(k_q, (sz_b, seq_len, d_model), jnp.float32)
    k = jax.random.normal(k_k, (sz_b, seq_len, d_model), jnp.float32)
    v = jax.random.normal(k_v, (sz_b, seq_len, d_model), jnp.float32)

    output, attn = multi_head_attention(params, q, k, v, n_head, d_k, d_v)
    jax.block_until_ready((output, attn))

    assert output.shape == (sz_b, seq_len, d_model)
    assert attn.shape == (n_head * sz_b, seq_len, seq_len)
    assert bool(jnp.all(jnp.isfinite(output))) and bool(jnp.all(jnp.isfinite(attn)))
    # softmax rows of attn must sum to 1
    assert bool(jnp.allclose(jnp.sum(attn, axis=-1), 1.0, atol=1e-5))
    print("KERNEL_OK")
</pallas_src>

<mosaic_0001>
module attributes {stable_mosaic.version = 11 : i64} {
  func.func @_mha_fused_kernel(%arg0: i32, %arg1: memref<1x8x32xf32, #tpu.memory_space<vmem>>, %arg2: memref<1x8x32xf32, #tpu.memory_space<vmem>>, %arg3: memref<1x8x32xf32, #tpu.memory_space<vmem>>, %arg4: memref<32x32xf32, #tpu.memory_space<vmem>>, %arg5: memref<1x32xf32, #tpu.memory_space<vmem>>, %arg6: memref<32x32xf32, #tpu.memory_space<vmem>>, %arg7: memref<1x32xf32, #tpu.memory_space<vmem>>, %arg8: memref<32x32xf32, #tpu.memory_space<vmem>>, %arg9: memref<1x32xf32, #tpu.memory_space<vmem>>, %arg10: memref<32x32xf32, #tpu.memory_space<vmem>>, %arg11: memref<1x32xf32, #tpu.memory_space<vmem>>, %arg12: memref<1x32xf32, #tpu.memory_space<vmem>>, %arg13: memref<1x32xf32, #tpu.memory_space<vmem>>, %arg14: memref<1x8x32xf32, #tpu.memory_space<vmem>>, %arg15: memref<4x1x8x8xf32, #tpu.memory_space<vmem>>) attributes {dimension_semantics = [#tpu.dimension_semantics<parallel>], iteration_bounds = array<i64: 2>, scalar_prefetch = 0 : i64, scratch_operands = 0 : i64, tpu.core_type = #tpu.core_type<tc>, window_params = [{transform_indices = @transform_0, window_bounds = array<i64: 1, 8, 32>}, {transform_indices = @transform_1, window_bounds = array<i64: 1, 8, 32>}, {transform_indices = @transform_2, window_bounds = array<i64: 1, 8, 32>}, {pipeline_mode = #tpu.pipeline_mode<synchronous>, transform_indices = @transform_3, window_bounds = array<i64: 32, 32>}, {pipeline_mode = #tpu.pipeline_mode<synchronous>, transform_indices = @transform_4, window_bounds = array<i64: 1, 32>}, {pipeline_mode = #tpu.pipeline_mode<synchronous>, transform_indices = @transform_5, window_bounds = array<i64: 32, 32>}, {pipeline_mode = #tpu.pipeline_mode<synchronous>, transform_indices = @transform_6, window_bounds = array<i64: 1, 32>}, {pipeline_mode = #tpu.pipeline_mode<synchronous>, transform_indices = @transform_7, window_bounds = array<i64: 32, 32>}, {pipeline_mode = #tpu.pipeline_mode<synchronous>, transform_indices = @transform_8, window_bounds = array<i64: 1, 32>}, {pipeline_mode = #tpu.pipeline_mode<synchronous>, transform_indices = @transform_9, window_bounds = array<i64: 32, 32>}, {pipeline_mode = #tpu.pipeline_mode<synchronous>, transform_indices = @transform_10, window_bounds = array<i64: 1, 32>}, {pipeline_mode = #tpu.pipeline_mode<synchronous>, transform_indices = @transform_11, window_bounds = array<i64: 1, 32>}, {pipeline_mode = #tpu.pipeline_mode<synchronous>, transform_indices = @transform_12, window_bounds = array<i64: 1, 32>}, {transform_indices = @transform_13, window_bounds = array<i64: 1, 8, 32>}, {transform_indices = @transform_14, window_bounds = array<i64: 4, 1, 8, 8>}]} {
    %c0 = arith.constant 0 : index
    %c0_0 = arith.constant 0 : index
    %c0_1 = arith.constant 0 : index
    %0 = vector.load %arg1[%c0, %c0_0, %c0_1] : memref<1x8x32xf32, #tpu.memory_space<vmem>>, vector<1x8x32xf32>
    %1 = vector.shape_cast %0 : vector<1x8x32xf32> to vector<8x32xf32>
    %c0_2 = arith.constant 0 : index
    %c0_3 = arith.constant 0 : index
    %c0_4 = arith.constant 0 : index
    %2 = vector.load %arg2[%c0_2, %c0_3, %c0_4] : memref<1x8x32xf32, #tpu.memory_space<vmem>>, vector<1x8x32xf32>
    %3 = vector.shape_cast %2 : vector<1x8x32xf32> to vector<8x32xf32>
    %c0_5 = arith.constant 0 : index
    %c0_6 = arith.constant 0 : index
    %c0_7 = arith.constant 0 : index
    %4 = vector.load %arg3[%c0_5, %c0_6, %c0_7] : memref<1x8x32xf32, #tpu.memory_space<vmem>>, vector<1x8x32xf32>
    %5 = vector.shape_cast %4 : vector<1x8x32xf32> to vector<8x32xf32>
    %c0_8 = arith.constant 0 : index
    %c0_9 = arith.constant 0 : index
    %6 = vector.load %arg4[%c0_8, %c0_9] : memref<32x32xf32, #tpu.memory_space<vmem>>, vector<32x32xf32>
    %cst = arith.constant dense<0.000000e+00> : vector<8x32xf32>
    %7 = tpu.matmul %1, %6, %cst {dimension_numbers = #tpu.dot_dimension_numbers<[1], [0], [0], [1], [0, 0, 1, 1], [], []>} : vector<8x32xf32>, vector<32x32xf32>, vector<8x32xf32> -> vector<8x32xf32>
    %c0_10 = arith.constant 0 : index
    %c0_11 = arith.constant 0 : index
    %8 = vector.load %arg5[%c0_10, %c0_11] : memref<1x32xf32, #tpu.memory_space<vmem>>, vector<1x32xf32>
    %9 = vector.broadcast %8 : vector<1x32xf32> to vector<8x32xf32>
    %10 = arith.addf %7, %9 : vector<8x32xf32>
    %c0_12 = arith.constant 0 : index
    %c0_13 = arith.constant 0 : index
    %11 = vector.load %arg6[%c0_12, %c0_13] : memref<32x32xf32, #tpu.memory_space<vmem>>, vector<32x32xf32>
    %cst_14 = arith.constant dense<0.000000e+00> : vector<8x32xf32>
    %12 = tpu.matmul %3, %11, %cst_14 {dimension_numbers = #tpu.dot_dimension_numbers<[1], [0], [0], [1], [0, 0, 1, 1], [], []>} : vector<8x32xf32>, vector<32x32xf32>, vector<8x32xf32> -> vector<8x32xf32>
    %c0_15 = arith.constant 0 : index
    %c0_16 = arith.constant 0 : index
    %13 = vector.load %arg7[%c0_15, %c0_16] : memref<1x32xf32, #tpu.memory_space<vmem>>, vector<1x32xf32>
    %14 = vector.broadcast %13 : vector<1x32xf32> to vector<8x32xf32>
    %15 = arith.addf %12, %14 : vector<8x32xf32>
    %c0_17 = arith.constant 0 : index
    %c0_18 = arith.constant 0 : index
    %16 = vector.load %arg8[%c0_17, %c0_18] : memref<32x32xf32, #tpu.memory_space<vmem>>, vector<32x32xf32>
    %cst_19 = arith.constant dense<0.000000e+00> : vector<8x32xf32>
    %17 = tpu.matmul %5, %16, %cst_19 {dimension_numbers = #tpu.dot_dimension_numbers<[1], [0], [0], [1], [0, 0, 1, 1], [], []>} : vector<8x32xf32>, vector<32x32xf32>, vector<8x32xf32> -> vector<8x32xf32>
    %c0_20 = arith.constant 0 : index
    %c0_21 = arith.constant 0 : index
    %18 = vector.load %arg9[%c0_20, %c0_21] : memref<1x32xf32, #tpu.memory_space<vmem>>, vector<1x32xf32>
    %19 = vector.broadcast %18 : vector<1x32xf32> to vector<8x32xf32>
    %20 = arith.addf %17, %19 : vector<8x32xf32>
    %cst_22 = arith.constant 0.353553385 : f32
    %21 = vector.broadcast %cst_22 : f32 to vector<8x32xf32>
    %22 = arith.mulf %10, %21 : vector<8x32xf32>
    %23 = vector.extract_strided_slice %22 {offsets = [0, 0], sizes = [8, 8], strides = [1, 1]} : vector<8x32xf32> to vector<8x8xf32>
    %24 = vector.extract_strided_slice %15 {offsets = [0, 0], sizes = [8, 8], strides = [1, 1]} : vector<8x32xf32> to vector<8x8xf32>
    %25 = vector.extract_strided_slice %20 {offsets = [0, 0], sizes = [8, 8], strides = [1, 1]} : vector<8x32xf32> to vector<8x8xf32>
    %cst_23 = arith.constant dense<0.000000e+00> : vector<8x8xf32>
    %26 = tpu.matmul %23, %24, %cst_23 {dimension_numbers = #tpu.dot_dimension_numbers<[1], [1], [0], [0], [0, 0, 1, 0], [], []>} : vector<8x8xf32>, vector<8x8xf32>, vector<8x8xf32> -> vector<8x8xf32>
    %cst_24 = arith.constant dense<0xFF800000> : vector<8xf32>
    %27 = vector.multi_reduction <maximumf>, %26, %cst_24 [1] : vector<8x8xf32> to vector<8xf32>
    %28 = vector.shape_cast %27 : vector<8xf32> to vector<8x1xf32>
    %29 = vector.broadcast %28 : vector<8x1xf32> to vector<8x8xf32>
    %30 = arith.subf %26, %29 : vector<8x8xf32>
    %31 = math.exp %30 : vector<8x8xf32>
    %cst_25 = arith.constant dense<0.000000e+00> : vector<8xf32>
    %32 = vector.multi_reduction <add>, %31, %cst_25 [1] : vector<8x8xf32> to vector<8xf32>
    %33 = vector.shape_cast %32 : vector<8xf32> to vector<8x1xf32>
    %34 = tpu.reciprocal %33 : vector<8x1xf32> -> vector<8x1xf32>
    %35 = vector.broadcast %34 : vector<8x1xf32> to vector<8x8xf32>
    %36 = arith.mulf %31, %35 : vector<8x8xf32>
    %c0_26 = arith.constant 0 : index
    %c0_27 = arith.constant 0 : index
    %c0_28 = arith.constant 0 : index
    %c0_29 = arith.constant 0 : index
    %37 = vector.load %arg15[%c0_26, %c0_27, %c0_28, %c0_29] : memref<4x1x8x8xf32, #tpu.memory_space<vmem>>, vector<1x1x8x8xf32>
    %38 = vector.shape_cast %37 : vector<1x1x8x8xf32> to vector<8x8xf32>
    %39 = vector.shape_cast %36 : vector<8x8xf32> to vector<1x1x8x8xf32>
    tpu.vector_store %arg15[%c0_26, %c0_27, %c0_28, %c0_29], %39 {strides = array<i32>} : memref<4x1x8x8xf32, #tpu.memory_space<vmem>>, vector<1x1x8x8xf32>,
    %cst_30 = arith.constant dense<0.000000e+00> : vector<8x8xf32>
    %40 = tpu.matmul %36, %25, %cst_30 {dimension_numbers = #tpu.dot_dimension_numbers<[1], [0], [0], [1], [0, 0, 1, 1], [], []>} : vector<8x8xf32>, vector<8x8xf32>, vector<8x8xf32> -> vector<8x8xf32>
    %41 = vector.extract_strided_slice %22 {offsets = [0, 8], sizes = [8, 8], strides = [1, 1]} : vector<8x32xf32> to vector<8x8xf32>
    %42 = vector.extract_strided_slice %15 {offsets = [0, 8], sizes = [8, 8], strides = [1, 1]} : vector<8x32xf32> to vector<8x8xf32>
    %43 = vector.extract_strided_slice %20 {offsets = [0, 8], sizes = [8, 8], strides = [1, 1]} : vector<8x32xf32> to vector<8x8xf32>
    %cst_31 = arith.constant dense<0.000000e+00> : vector<8x8xf32>
    %44 = tpu.matmul %41, %42, %cst_31 {dimension_numbers = #tpu.dot_dimension_numbers<[1], [1], [0], [0], [0, 0, 1, 0], [], []>} : vector<8x8xf32>, vector<8x8xf32>, vector<8x8xf32> -> vector<8x8xf32>
    %cst_32 = arith.constant dense<0xFF800000> : vector<8xf32>
    %45 = vector.multi_reduction <maximumf>, %44, %cst_32 [1] : vector<8x8xf32> to vector<8xf32>
    %46 = vector.shape_cast %45 : vector<8xf32> to vector<8x1xf32>
    %47 = vector.broadcast %46 : vector<8x1xf32> to vector<8x8xf32>
    %48 = arith.subf %44, %47 : vector<8x8xf32>
    %49 = math.exp %48 : vector<8x8xf32>
    %cst_33 = arith.constant dense<0.000000e+00> : vector<8xf32>
    %50 = vector.multi_reduction <add>, %49, %cst_33 [1] : vector<8x8xf32> to vector<8xf32>
    %51 = vector.shape_cast %50 : vector<8xf32> to vector<8x1xf32>
    %52 = tpu.reciprocal %51 : vector<8x1xf32> -> vector<8x1xf32>
    %53 = vector.broadcast %52 : vector<8x1xf32> to vector<8x8xf32>
    %54 = arith.mulf %49, %53 : vector<8x8xf32>
    %c1 = arith.constant 1 : index
    %c0_34 = arith.constant 0 : index
    %c0_35 = arith.constant 0 : index
    %c0_36 = arith.constant 0 : index
    %55 = vector.load %arg15[%c1, %c0_34, %c0_35, %c0_36] : memref<4x1x8x8xf32, #tpu.memory_space<vmem>>, vector<1x1x8x8xf32>
    %56 = vector.shape_cast %55 : vector<1x1x8x8xf32> to vector<8x8xf32>
    %57 = vector.shape_cast %54 : vector<8x8xf32> to vector<1x1x8x8xf32>
    tpu.vector_store %arg15[%c1, %c0_34, %c0_35, %c0_36], %57 {strides = array<i32>} : memref<4x1x8x8xf32, #tpu.memory_space<vmem>>, vector<1x1x8x8xf32>,
    %cst_37 = arith.constant dense<0.000000e+00> : vector<8x8xf32>
    %58 = tpu.matmul %54, %43, %cst_37 {dimension_numbers = #tpu.dot_dimension_numbers<[1], [0], [0], [1], [0, 0, 1, 1], [], []>} : vector<8x8xf32>, vector<8x8xf32>, vector<8x8xf32> -> vector<8x8xf32>
    %59 = vector.extract_strided_slice %22 {offsets = [0, 16], sizes = [8, 8], strides = [1, 1]} : vector<8x32xf32> to vector<8x8xf32>
    %60 = vector.extract_strided_slice %15 {offsets = [0, 16], sizes = [8, 8], strides = [1, 1]} : vector<8x32xf32> to vector<8x8xf32>
    %61 = vector.extract_strided_slice %20 {offsets = [0, 16], sizes = [8, 8], strides = [1, 1]} : vector<8x32xf32> to vector<8x8xf32>
    %cst_38 = arith.constant dense<0.000000e+00> : vector<8x8xf32>
    %62 = tpu.matmul %59, %60, %cst_38 {dimension_numbers = #tpu.dot_dimension_numbers<[1], [1], [0], [0], [0, 0, 1, 0], [], []>} : vector<8x8xf32>, vector<8x8xf32>, vector<8x8xf32> -> vector<8x8xf32>
    %cst_39 = arith.constant dense<0xFF800000> : vector<8xf32>
    %63 = vector.multi_reduction <maximumf>, %62, %cst_39 [1] : vector<8x8xf32> to vector<8xf32>
    %64 = vector.shape_cast %63 : vector<8xf32> to vector<8x1xf32>
    %65 = vector.broadcast %64 : vector<8x1xf32> to vector<8x8xf32>
    %66 = arith.subf %62, %65 : vector<8x8xf32>
    %67 = math.exp %66 : vector<8x8xf32>
    %cst_40 = arith.constant dense<0.000000e+00> : vector<8xf32>
    %68 = vector.multi_reduction <add>, %67, %cst_40 [1] : vector<8x8xf32> to vector<8xf32>
    %69 = vector.shape_cast %68 : vector<8xf32> to vector<8x1xf32>
    %70 = tpu.reciprocal %69 : vector<8x1xf32> -> vector<8x1xf32>
    %71 = vector.broadcast %70 : vector<8x1xf32> to vector<8x8xf32>
    %72 = arith.mulf %67, %71 : vector<8x8xf32>
    %c2 = arith.constant 2 : index
    %c0_41 = arith.constant 0 : index
    %c0_42 = arith.constant 0 : index
    %c0_43 = arith.constant 0 : index
    %73 = vector.load %arg15[%c2, %c0_41, %c0_42, %c0_43] : memref<4x1x8x8xf32, #tpu.memory_space<vmem>>, vector<1x1x8x8xf32>
    %74 = vector.shape_cast %73 : vector<1x1x8x8xf32> to vector<8x8xf32>
    %75 = vector.shape_cast %72 : vector<8x8xf32> to vector<1x1x8x8xf32>
    tpu.vector_store %arg15[%c2, %c0_41, %c0_42, %c0_43], %75 {strides = array<i32>} : memref<4x1x8x8xf32, #tpu.memory_space<vmem>>, vector<1x1x8x8xf32>,
    %cst_44 = arith.constant dense<0.000000e+00> : vector<8x8xf32>
    %76 = tpu.matmul %72, %61, %cst_44 {dimension_numbers = #tpu.dot_dimension_numbers<[1], [0], [0], [1], [0, 0, 1, 1], [], []>} : vector<8x8xf32>, vector<8x8xf32>, vector<8x8xf32> -> vector<8x8xf32>
    %77 = vector.extract_strided_slice %22 {offsets = [0, 24], sizes = [8, 8], strides = [1, 1]} : vector<8x32xf32> to vector<8x8xf32>
    %78 = vector.extract_strided_slice %15 {offsets = [0, 24], sizes = [8, 8], strides = [1, 1]} : vector<8x32xf32> to vector<8x8xf32>
    %79 = vector.extract_strided_slice %20 {offsets = [0, 24], sizes = [8, 8], strides = [1, 1]} : vector<8x32xf32> to vector<8x8xf32>
    %cst_45 = arith.constant dense<0.000000e+00> : vector<8x8xf32>
    %80 = tpu.matmul %77, %78, %cst_45 {dimension_numbers = #tpu.dot_dimension_numbers<[1], [1], [0], [0], [0, 0, 1, 0], [], []>} : vector<8x8xf32>, vector<8x8xf32>, vector<8x8xf32> -> vector<8x8xf32>
    %cst_46 = arith.constant dense<0xFF800000> : vector<8xf32>
    %81 = vector.multi_reduction <maximumf>, %80, %cst_46 [1] : vector<8x8xf32> to vector<8xf32>
    %82 = vector.shape_cast %81 : vector<8xf32> to vector<8x1xf32>
    %83 = vector.broadcast %82 : vector<8x1xf32> to vector<8x8xf32>
    %84 = arith.subf %80, %83 : vector<8x8xf32>
    %85 = math.exp %84 : vector<8x8xf32>
    %cst_47 = arith.constant dense<0.000000e+00> : vector<8xf32>
    %86 = vector.multi_reduction <add>, %85, %cst_47 [1] : vector<8x8xf32> to vector<8xf32>
    %87 = vector.shape_cast %86 : vector<8xf32> to vector<8x1xf32>
    %88 = tpu.reciprocal %87 : vector<8x1xf32> -> vector<8x1xf32>
    %89 = vector.broadcast %88 : vector<8x1xf32> to vector<8x8xf32>
    %90 = arith.mulf %85, %89 : vector<8x8xf32>
    %c3 = arith.constant 3 : index
    %c0_48 = arith.constant 0 : index
    %c0_49 = arith.constant 0 : index
    %c0_50 = arith.constant 0 : index
    %91 = vector.load %arg15[%c3, %c0_48, %c0_49, %c0_50] : memref<4x1x8x8xf32, #tpu.memory_space<vmem>>, vector<1x1x8x8xf32>
    %92 = vector.shape_cast %91 : vector<1x1x8x8xf32> to vector<8x8xf32>
    %93 = vector.shape_cast %90 : vector<8x8xf32> to vector<1x1x8x8xf32>
    tpu.vector_store %arg15[%c3, %c0_48, %c0_49, %c0_50], %93 {strides = array<i32>} : memref<4x1x8x8xf32, #tpu.memory_space<vmem>>, vector<1x1x8x8xf32>,
    %cst_51 = arith.constant dense<0.000000e+00> : vector<8x8xf32>
    %94 = tpu.matmul %90, %79, %cst_51 {dimension_numbers = #tpu.dot_dimension_numbers<[1], [0], [0], [1], [0, 0, 1, 1], [], []>} : vector<8x8xf32>, vector<8x8xf32>, vector<8x8xf32> -> vector<8x8xf32>
    %95 = tpu.concatenate %40, %58, %76, %94 in 1 : vector<8x8xf32>, vector<8x8xf32>, vector<8x8xf32>, vector<8x8xf32> -> vector<8x32xf32>
    %c0_52 = arith.constant 0 : index
    %c0_53 = arith.constant 0 : index
    %96 = vector.load %arg10[%c0_52, %c0_53] : memref<32x32xf32, #tpu.memory_space<vmem>>, vector<32x32xf32>
    %cst_54 = arith.constant dense<0.000000e+00> : vector<8x32xf32>
    %97 = tpu.matmul %95, %96, %cst_54 {dimension_numbers = #tpu.dot_dimension_numbers<[1], [0], [0], [1], [0, 0, 1, 1], [], []>} : vector<8x32xf32>, vector<32x32xf32>, vector<8x32xf32> -> vector<8x32xf32>
    %c0_55 = arith.constant 0 : index
    %c0_56 = arith.constant 0 : index
    %98 = vector.load %arg11[%c0_55, %c0_56] : memref<1x32xf32, #tpu.memory_space<vmem>>, vector<1x32xf32>
    %99 = vector.broadcast %98 : vector<1x32xf32> to vector<8x32xf32>
    %100 = arith.addf %97, %99 : vector<8x32xf32>
    %101 = arith.addf %100, %1 : vector<8x32xf32>
    %cst_57 = arith.constant dense<0.000000e+00> : vector<8xf32>
    %102 = vector.multi_reduction <add>, %101, %cst_57 [1] : vector<8x32xf32> to vector<8xf32>
    %103 = vector.shape_cast %102 : vector<8xf32> to vector<8x1xf32>
    %cst_58 = arith.constant 3.200000e+01 : f32
    %104 = vector.broadcast %cst_58 : f32 to vector<8x1xf32>
    %105 = arith.divf %103, %104 : vector<8x1xf32>
    %106 = vector.broadcast %105 : vector<8x1xf32> to vector<8x32xf32>
    %107 = arith.subf %101, %106 : vector<8x32xf32>
    %108 = arith.mulf %107, %107 : vector<8x32xf32>
    %cst_59 = arith.constant dense<0.000000e+00> : vector<8xf32>
    %109 = vector.multi_reduction <add>, %108, %cst_59 [1] : vector<8x32xf32> to vector<8xf32>
    %110 = vector.shape_cast %109 : vector<8xf32> to vector<8x1xf32>
    %cst_60 = arith.constant 3.200000e+01 : f32
    %111 = vector.broadcast %cst_60 : f32 to vector<8x1xf32>
    %112 = arith.divf %110, %111 : vector<8x1xf32>
    %113 = vector.broadcast %105 : vector<8x1xf32> to vector<8x32xf32>
    %114 = arith.subf %101, %113 : vector<8x32xf32>
    %cst_61 = arith.constant 9.99999974E-6 : f32
    %115 = vector.broadcast %cst_61 : f32 to vector<8x1xf32>
    %116 = arith.addf %112, %115 : vector<8x1xf32>
    %117 = math.rsqrt %116 : vector<8x1xf32>
    %118 = vector.broadcast %117 : vector<8x1xf32> to vector<8x32xf32>
    %119 = arith.mulf %114, %118 : vector<8x32xf32>
    %c0_62 = arith.constant 0 : index
    %c0_63 = arith.constant 0 : index
    %120 = vector.load %arg12[%c0_62, %c0_63] : memref<1x32xf32, #tpu.memory_space<vmem>>, vector<1x32xf32>
    %121 = vector.broadcast %120 : vector<1x32xf32> to vector<8x32xf32>
    %122 = arith.mulf %119, %121 : vector<8x32xf32>
    %c0_64 = arith.constant 0 : index
    %c0_65 = arith.constant 0 : index
    %123 = vector.load %arg13[%c0_64, %c0_65] : memref<1x32xf32, #tpu.memory_space<vmem>>, vector<1x32xf32>
    %124 = vector.broadcast %123 : vector<1x32xf32> to vector<8x32xf32>
    %125 = arith.addf %122, %124 : vector<8x32xf32>
    %c0_66 = arith.constant 0 : index
    %c0_67 = arith.constant 0 : index
    %c0_68 = arith.constant 0 : index
    %126 = vector.load %arg14[%c0_66, %c0_67, %c0_68] : memref<1x8x32xf32, #tpu.memory_space<vmem>>, vector<1x8x32xf32>
    %127 = vector.shape_cast %126 : vector<1x8x32xf32> to vector<8x32xf32>
    %128 = vector.shape_cast %125 : vector<8x32xf32> to vector<1x8x32xf32>
    tpu.vector_store %arg14[%c0_66, %c0_67, %c0_68], %128 {strides = array<i32>} : memref<1x8x32xf32, #tpu.memory_space<vmem>>, vector<1x8x32xf32>,
    return
  }
  func.func @transform_0(%arg0: i32) -> (i32, i32, i32) {
    %c0_i32 = arith.constant 0 : i32
    %c0_i32_0 = arith.constant 0 : i32
    %c0_i32_1 = arith.constant 0 : i32
    return %arg0, %c0_i32, %c0_i32_0 : i32, i32, i32
  }
  func.func @transform_1(%arg0: i32) -> (i32, i32, i32) {
    %c0_i32 = arith.constant 0 : i32
    %c0_i32_0 = arith.constant 0 : i32
    %c0_i32_1 = arith.constant 0 : i32
    return %arg0, %c0_i32, %c0_i32_0 : i32, i32, i32
  }
  func.func @transform_2(%arg0: i32) -> (i32, i32, i32) {
    %c0_i32 = arith.constant 0 : i32
    %c0_i32_0 = arith.constant 0 : i32
    %c0_i32_1 = arith.constant 0 : i32
    return %arg0, %c0_i32, %c0_i32_0 : i32, i32, i32
  }
  func.func @transform_3(%arg0: i32) -> (i32, i32) {
    %c0_i32 = arith.constant 0 : i32
    %c0_i32_0 = arith.constant 0 : i32
    %c0_i32_1 = arith.constant 0 : i32
    return %c0_i32, %c0_i32_0 : i32, i32
  }
  func.func @transform_4(%arg0: i32) -> (i32, i32) {
    %c0_i32 = arith.constant 0 : i32
    %c0_i32_0 = arith.constant 0 : i32
    %c0_i32_1 = arith.constant 0 : i32
    return %c0_i32, %c0_i32_0 : i32, i32
  }
  func.func @transform_5(%arg0: i32) -> (i32, i32) {
    %c0_i32 = arith.constant 0 : i32
    %c0_i32_0 = arith.constant 0 : i32
    %c0_i32_1 = arith.constant 0 : i32
    return %c0_i32, %c0_i32_0 : i32, i32
  }
  func.func @transform_6(%arg0: i32) -> (i32, i32) {
    %c0_i32 = arith.constant 0 : i32
    %c0_i32_0 = arith.constant 0 : i32
    %c0_i32_1 = arith.constant 0 : i32
    return %c0_i32, %c0_i32_0 : i32, i32
  }
  func.func @transform_7(%arg0: i32) -> (i32, i32) {
    %c0_i32 = arith.constant 0 : i32
    %c0_i32_0 = arith.constant 0 : i32
    %c0_i32_1 = arith.constant 0 : i32
    return %c0_i32, %c0_i32_0 : i32, i32
  }
  func.func @transform_8(%arg0: i32) -> (i32, i32) {
    %c0_i32 = arith.constant 0 : i32
    %c0_i32_0 = arith.constant 0 : i32
    %c0_i32_1 = arith.constant 0 : i32
    return %c0_i32, %c0_i32_0 : i32, i32
  }
  func.func @transform_9(%arg0: i32) -> (i32, i32) {
    %c0_i32 = arith.constant 0 : i32
    %c0_i32_0 = arith.constant 0 : i32
    %c0_i32_1 = arith.constant 0 : i32
    return %c0_i32, %c0_i32_0 : i32, i32
  }
  func.func @transform_10(%arg0: i32) -> (i32, i32) {
    %c0_i32 = arith.constant 0 : i32
    %c0_i32_0 = arith.constant 0 : i32
    %c0_i32_1 = arith.constant 0 : i32
    return %c0_i32, %c0_i32_0 : i32, i32
  }
  func.func @transform_11(%arg0: i32) -> (i32, i32) {
    %c0_i32 = arith.constant 0 : i32
    %c0_i32_0 = arith.constant 0 : i32
    %c0_i32_1 = arith.constant 0 : i32
    return %c0_i32, %c0_i32_0 : i32, i32
  }
  func.func @transform_12(%arg0: i32) -> (i32, i32) {
    %c0_i32 = arith.constant 0 : i32
    %c0_i32_0 = arith.constant 0 : i32
    %c0_i32_1 = arith.constant 0 : i32
    return %c0_i32, %c0_i32_0 : i32, i32
  }
  func.func @transform_13(%arg0: i32) -> (i32, i32, i32) {
    %c0_i32 = arith.constant 0 : i32
    %c0_i32_0 = arith.constant 0 : i32
    %c0_i32_1 = arith.constant 0 : i32
    return %arg0, %c0_i32, %c0_i32_0 : i32, i32, i32
  }
  func.func @transform_14(%arg0: i32) -> (i32, i32, i32, i32) {
    %c0_i32 = arith.constant 0 : i32
    %c0_i32_0 = arith.constant 0 : i32
    %c0_i32_1 = arith.constant 0 : i32
    %c0_i32_2 = arith.constant 0 : i32
    return %c0_i32, %arg0, %c0_i32_0, %c0_i32_1 : i32, i32, i32, i32
  }
}

</mosaic_0001>

<llo_original>
// kernel: tpu_custom_call.1
$region0: #{tpu_custom_call.1}
  #allocation0 [shape = 'u32[]', space=smem, size = 0x4, offset = 0x4, fixed_abs, tag = 'smem constant byte address 0x4 - core index']
  #allocation1 [shape = 'u32[144,128]{1,0:T(1,128)}', space=vmem, size = 0x12000, scoped, tag = 'internal scratch']
  %s0 = inlined_call_operand.hbm [shape: f32[2,8,32], index: 0, kind: input, shape index: {}]
  %s1 = inlined_call_operand.hbm [shape: f32[2,8,32], index: 1, kind: input, shape index: {}]
  %s2 = inlined_call_operand.hbm [shape: f32[2,8,32], index: 2, kind: input, shape index: {}]
  %s3 = inlined_call_operand.hbm [shape: f32[32,32], index: 3, kind: input, shape index: {}]
  %s4 = inlined_call_operand.vmem [shape: f32[1,32], index: 4, kind: input, shape index: {}]
  %s5 = inlined_call_operand.hbm [shape: f32[32,32], index: 5, kind: input, shape index: {}]
  %s6 = inlined_call_operand.vmem [shape: f32[1,32], index: 6, kind: input, shape index: {}]
  %s7 = inlined_call_operand.hbm [shape: f32[32,32], index: 7, kind: input, shape index: {}]
  %s8 = inlined_call_operand.hbm [shape: f32[1,32], index: 8, kind: input, shape index: {}]
  %s9 = inlined_call_operand.vmem [shape: f32[32,32], index: 9, kind: input, shape index: {}]
  %s10 = inlined_call_operand.vmem [shape: f32[1,32], index: 10, kind: input, shape index: {}]
  %s11 = inlined_call_operand.vmem [shape: f32[1,32], index: 11, kind: input, shape index: {}]
  %s12 = inlined_call_operand.vmem [shape: f32[1,32], index: 12, kind: input, shape index: {}]
  %s13 = inlined_call_operand.hbm [shape: f32[2,8,32], index: 13, kind: output, shape index: {0}]
  %s14 = inlined_call_operand.hbm [shape: f32[4,2,8,8], index: 14, kind: output, shape index: {1}]
  %15 = xla_tuple %s13, %s14
  %s16 = sld [smem:[#allocation0]]
  $region121: #{tpu_custom_call.1} parent=0
    _
  %s18 = ssub.s32 1, %s16
  %s19 = scalar_select 0, %s18, %s16
  $region1: #{tpu_custom_call.1} parent=0
    #allocation2 [shape = 'u8[8192]{0}', space=vmem, size = 0x2000, scoped, tag = 'input window, operand 0']
    #allocation3 [shape = 's32[2]{0}', space=sflag, size = 0x8, scoped, tag = 'scoped memory for tpu_custom_call.1']
    #allocation4 [shape = 's32[2]{0}', space=sflag, size = 0x8, scoped, tag = 'scoped memory for tpu_custom_call.1']
    #allocation5 [shape = 'u8[8192]{0}', space=vmem, size = 0x2000, scoped, tag = 'input window, operand 1']
    #allocation6 [shape = 's32[2]{0}', space=sflag, size = 0x8, scoped, tag = 'scoped memory for tpu_custom_call.1']
    #allocation7 [shape = 'u8[8192]{0}', space=vmem, size = 0x2000, scoped, tag = 'input window, operand 2']
    #allocation8 [shape = 'u8[16384]{0}', space=vmem, size = 0x4000, scoped, tag = 'input window, operand 3, single buffered']
    #allocation9 [shape = 's32[1]{0}', space=sflag, size = 0x4, scoped, tag = 'scoped memory for tpu_custom_call.1']
    #allocation10 [shape = 'u8[16384]{0}', space=vmem, size = 0x4000, scoped, tag = 'input window, operand 5, single buffered']
    #allocation11 [shape = 'u8[16384]{0}', space=vmem, size = 0x4000, scoped, tag = 'input window, operand 7, single buffered']
    #allocation12 [shape = 's32[1]{0}', space=sflag, size = 0x4, scoped, tag = 'scoped memory for tpu_custom_call.1']
    #allocation13 [shape = 'u8[512]{0}', space=vmem, size = 0x400, scoped, tag = 'input window, operand 8, single buffered']
    #allocation14 [shape = 'u8[8192]{0}', space=vmem, size = 0x2000, scoped, tag = 'output window, operand 0']
    #allocation15 [shape = 'u8[32768]{0}', space=vmem, size = 0x8000, scoped, tag = 'output window, operand 1']
    #allocation16 [shape = 's32[2]{0}', space=sflag, size = 0x8, scoped, tag = 'scoped memory for tpu_custom_call.1']
    %20 = vsyncpa [#allocation3], 0
    %s21 = scalar_lea.sflag [#allocation3], 1
    %22 = vsyncpa %s21, 0
    %23 = vsyncpa [#allocation6], 0
    %s24 = scalar_lea.sflag [#allocation6], 1
    %25 = vsyncpa %s24, 0
    %26 = vsyncpa [#allocation9], 0
    %27 = vsyncpa [#allocation12], 0
    %28 = vsyncpa [#allocation4], 0
    %s29 = scalar_lea.sflag [#allocation4], 1
    %30 = vsyncpa %s29, 0
    %31 = vsyncpa [#allocation16], 0
    %s32 = scalar_lea.sflag [#allocation16], 1
    %33 = vsyncpa %s32, 0
    loop: start=0, step=1, limit=4
    $region2: #{tpu_custom_call.1} parent=1 // loop_pre_header
      _
    $region3: #{tpu_custom_call.1} parent=1 // loop_header
      %s35 = sphi 0, %s39
      %p36 = scmp.ge.s32.totalorder %s35, 4
      %s45 = sphi 0, %s47
      %s48 = sphi 0, %s45
      %s49 = sphi 0, %s48
      %s65 = sphi 0, %s49
      %s71 = sphi 0, %s73
      %s74 = sphi 0, %s71
      %s75 = sphi 0, %s74
      %s91 = sphi 0, %s75
      %s97 = sphi 0, %s99
      %s100 = sphi 0, %s97
      %s101 = sphi 0, %s100
      %s117 = sphi 0, %s101
      %s121 = sphi 0, %s121
      %s123 = sphi 0, %s121
      %s124 = sphi 0, %s123
      %s138 = sphi 0, %s124
      %s142 = sphi 0, %s142
      %s144 = sphi 0, %s142
      %s145 = sphi 0, %s144
      %s159 = sphi 0, %s145
      %s163 = sphi 0, %s163
      %s165 = sphi 0, %s163
      %s166 = sphi 0, %s165
      %s180 = sphi 0, %s166
      %s184 = sphi 0, %s184
      %s186 = sphi 0, %s184
      %s187 = sphi 0, %s186
      %s201 = sphi 0, %s187
      %s205 = sphi 0, %s205
      %s207 = sphi 0, %s205
      %s208 = sphi 0, %s207
      %s222 = sphi 0, %s208
      %s226 = sphi 0, %s226
      %s228 = sphi 0, %s226
      %s229 = sphi 0, %s228
      %s243 = sphi 0, %s229
      %s247 = sphi 0, %s247
      %s249 = sphi 0, %s247
      %s250 = sphi 0, %s249
      %s264 = sphi 0, %s250
      %s268 = sphi 0, %s268
      %s270 = sphi 0, %s268
      %s271 = sphi 0, %s270
      %s285 = sphi 0, %s271
      %s289 = sphi 0, %s289
      %s291 = sphi 0, %s289
      %s292 = sphi 0, %s291
      %s306 = sphi 0, %s292
      %s310 = sphi 0, %s310
      %s312 = sphi 0, %s310
      %s313 = sphi 0, %s312
      %s327 = sphi 0, %s313
      %s333 = sphi 0, %s335
      %s336 = sphi 0, %s333
      %s337 = sphi 0, %s336
      %s353 = sphi 0, %s337
      %s359 = sphi 0, %s361
      %s362 = sphi 0, %s359
      %s363 = sphi 0, %s362
      %s379 = sphi 0, %s363
    $region4: #{tpu_custom_call.1} parent=1 // loop_header_branch
      %38 = sbr.rel (%p36) target = $region8
    $region5: #{tpu_custom_call.1} parent=1 // loop_body
      %s40 = ssub.s32 %s35, 1
      %s41 = ssub.s32 %s35, 2
      %s42 = sadd.s32 %s35, 1
      %s43 = ssub.s32 %s35, %s42
      %p44 = scmp.eq.s32.totalorder %s43, 0
      %s46 = sadd.s32 %s45, 1
      %s47 = scalar_select %p44, %s45, %s46
      %p50 = pneg %p44
      %p51 = scmp.eq.s32.totalorder %s35, 1
      %p52 = por %p50, %p51
      %p53 = scmp.ne.s32.totalorder %s45, %s48
      %p54 = scmp.eq.s32.totalorder %s35, 0
      %p55 = por %p53, %p54
      %p56 = scmp.ne.s32.totalorder %s45, %s48
      %p57 = scmp.eq.s32.totalorder %s40, 1
      %p58 = por %p56, %p57
      %p59 = scmp.ne.s32.totalorder %s48, %s49
      %p60 = scmp.eq.s32.totalorder %s40, 0
      %p61 = por %p59, %p60
      %p62 = scmp.ne.s32.totalorder %s48, %s49
      %p63 = scmp.eq.s32.totalorder %s41, 1
      %p64 = por %p62, %p63
      %p66 = scmp.ne.s32.totalorder %s49, %s65
      %p67 = scmp.eq.s32.totalorder %s41, 0
      %p68 = por %p66, %p67
      %s69 = ssub.s32 %s35, %s42
      %p70 = scmp.eq.s32.totalorder %s69, 0
      %s72 = sadd.s32 %s71, 1
      %s73 = scalar_select %p70, %s71, %s72
      %p76 = pneg %p70
      %p77 = scmp.eq.s32.totalorder %s35, 1
      %p78 = por %p76, %p77
      %p79 = scmp.ne.s32.totalorder %s71, %s74
      %p80 = scmp.eq.s32.totalorder %s35, 0
      %p81 = por %p79, %p80
      %p82 = scmp.ne.s32.totalorder %s71, %s74
      %p83 = scmp.eq.s32.totalorder %s40, 1
      %p84 = por %p82, %p83
      %p85 = scmp.ne.s32.totalorder %s74, %s75
      %p86 = scmp.eq.s32.totalorder %s40, 0
      %p87 = por %p85, %p86
      %p88 = scmp.ne.s32.totalorder %s74, %s75
      %p89 = scmp.eq.s32.totalorder %s41, 1
      %p90 = por %p88, %p89
      %p92 = scmp.ne.s32.totalorder %s75, %s91
      %p93 = scmp.eq.s32.totalorder %s41, 0
      %p94 = por %p92, %p93
      %s95 = ssub.s32 %s35, %s42
      %p96 = scmp.eq.s32.totalorder %s95, 0
      %s98 = sadd.s32 %s97, 1
      %s99 = scalar_select %p96, %s97, %s98
      %p102 = pneg %p96
      %p103 = scmp.eq.s32.totalorder %s35, 1
      %p104 = por %p102, %p103
      %p105 = scmp.ne.s32.totalorder %s97, %s100
      %p106 = scmp.eq.s32.totalorder %s35, 0
      %p107 = por %p105, %p106
      %p108 = scmp.ne.s32.totalorder %s97, %s100
      %p109 = scmp.eq.s32.totalorder %s40, 1
      %p110 = por %p108, %p109
      %p111 = scmp.ne.s32.totalorder %s100, %s101
      %p112 = scmp.eq.s32.totalorder %s40, 0
      %p113 = por %p111, %p112
      %p114 = scmp.ne.s32.totalorder %s100, %s101
      %p115 = scmp.eq.s32.totalorder %s41, 1
      %p116 = por %p114, %p115
      %p118 = scmp.ne.s32.totalorder %s101, %s117
      %p119 = scmp.eq.s32.totalorder %s41, 0
      %p120 = por %p118, %p119
      %s122 = sadd.s32 %s121, 1
      %p125 = scmp.eq.s32.totalorder %s35, 1
      %p126 = scmp.ne.s32.totalorder %s121, %s123
      %p127 = scmp.eq.s32.totalorder %s35, 0
      %p128 = por %p126, %p127
      %p129 = scmp.ne.s32.totalorder %s121, %s123
      %p130 = scmp.eq.s32.totalorder %s40, 1
      %p131 = por %p129, %p130
      %p132 = scmp.ne.s32.totalorder %s123, %s124
      %p133 = scmp.eq.s32.totalorder %s40, 0
      %p134 = por %p132, %p133
      %p135 = scmp.ne.s32.totalorder %s123, %s124
      %p136 = scmp.eq.s32.totalorder %s41, 1
      %p137 = por %p135, %p136
      %p139 = scmp.ne.s32.totalorder %s124, %s138
      %p140 = scmp.eq.s32.totalorder %s41, 0
      %p141 = por %p139, %p140
      %s143 = sadd.s32 %s142, 1
      %p146 = scmp.eq.s32.totalorder %s35, 1
      %p147 = scmp.ne.s32.totalorder %s142, %s144
      %p148 = scmp.eq.s32.totalorder %s35, 0
      %p149 = por %p147, %p148
      %p150 = scmp.ne.s32.totalorder %s142, %s144
      %p151 = scmp.eq.s32.totalorder %s40, 1
      %p152 = por %p150, %p151
      %p153 = scmp.ne.s32.totalorder %s144, %s145
      %p154 = scmp.eq.s32.totalorder %s40, 0
      %p155 = por %p153, %p154
      %p156 = scmp.ne.s32.totalorder %s144, %s145
      %p157 = scmp.eq.s32.totalorder %s41, 1
      %p158 = por %p156, %p157
      %p160 = scmp.ne.s32.totalorder %s145, %s159
      %p161 = scmp.eq.s32.totalorder %s41, 0
      %p162 = por %p160, %p161
      %s164 = sadd.s32 %s163, 1
      %p167 = scmp.eq.s32.totalorder %s35, 1
      %p168 = scmp.ne.s32.totalorder %s163, %s165
      %p169 = scmp.eq.s32.totalorder %s35, 0
      %p170 = por %p168, %p169
      %p171 = scmp.ne.s32.totalorder %s163, %s165
      %p172 = scmp.eq.s32.totalorder %s40, 1
      %p173 = por %p171, %p172
      %p174 = scmp.ne.s32.totalorder %s165, %s166
      %p175 = scmp.eq.s32.totalorder %s40, 0
      %p176 = por %p174, %p175
      %p177 = scmp.ne.s32.totalorder %s165, %s166
      %p178 = scmp.eq.s32.totalorder %s41, 1
      %p179 = por %p177, %p178
      %p181 = scmp.ne.s32.totalorder %s166, %s180
      %p182 = scmp.eq.s32.totalorder %s41, 0
      %p183 = por %p181, %p182
      %s185 = sadd.s32 %s184, 1
      %p188 = scmp.eq.s32.totalorder %s35, 1
      %p189 = scmp.ne.s32.totalorder %s184, %s186
      %p190 = scmp.eq.s32.totalorder %s35, 0
      %p191 = por %p189, %p190
      %p192 = scmp.ne.s32.totalorder %s184, %s186
      %p193 = scmp.eq.s32.totalorder %s40, 1
      %p194 = por %p192, %p193
      %p195 = scmp.ne.s32.totalorder %s186, %s187
      %p196 = scmp.eq.s32.totalorder %s40, 0
      %p197 = por %p195, %p196
      %p198 = scmp.ne.s32.totalorder %s186, %s187
      %p199 = scmp.eq.s32.totalorder %s41, 1
      %p200 = por %p198, %p199
      %p202 = scmp.ne.s32.totalorder %s187, %s201
      %p203 = scmp.eq.s32.totalorder %s41, 0
      %p204 = por %p202, %p203
      %s206 = sadd.s32 %s205, 1
      %p209 = scmp.eq.s32.totalorder %s35, 1
      %p210 = scmp.ne.s32.totalorder %s205, %s207
      %p211 = scmp.eq.s32.totalorder %s35, 0
      %p212 = por %p210, %p211
      %p213 = scmp.ne.s32.totalorder %s205, %s207
      %p214 = scmp.eq.s32.totalorder %s40, 1
      %p215 = por %p213, %p214
      %p216 = scmp.ne.s32.totalorder %s207, %s208
      %p217 = scmp.eq.s32.totalorder %s40, 0
      %p218 = por %p216, %p217
      %p219 = scmp.ne.s32.totalorder %s207, %s208
      %p220 = scmp.eq.s32.totalorder %s41, 1
      %p221 = por %p219, %p220
      %p223 = scmp.ne.s32.totalorder %s208, %s222
      %p224 = scmp.eq.s32.totalorder %s41, 0
      %p225 = por %p223, %p224
      %s227 = sadd.s32 %s226, 1
      %p230 = scmp.eq.s32.totalorder %s35, 1
      %p231 = scmp.ne.s32.totalorder %s226, %s228
      %p232 = scmp.eq.s32.totalorder %s35, 0
      %p233 = por %p231, %p232
      %p234 = scmp.ne.s32.totalorder %s226, %s228
      %p235 = scmp.eq.s32.totalorder %s40, 1
      %p236 = por %p234, %p235
      %p237 = scmp.ne.s32.totalorder %s228, %s229
      %p238 = scmp.eq.s32.totalorder %s40, 0
      %p239 = por %p237, %p238
      %p240 = scmp.ne.s32.totalorder %s228, %s229
      %p241 = scmp.eq.s32.totalorder %s41, 1
      %p242 = por %p240, %p241
      %p244 = scmp.ne.s32.totalorder %s229, %s243
      %p245 = scmp.eq.s32.totalorder %s41, 0
      %p246 = por %p244, %p245
      %s248 = sadd.s32 %s247, 1
      %p251 = scmp.eq.s32.totalorder %s35, 1
      %p252 = scmp.ne.s32.totalorder %s247, %s249
      %p253 = scmp.eq.s32.totalorder %s35, 0
      %p254 = por %p252, %p253
      %p255 = scmp.ne.s32.totalorder %s247, %s249
      %p256 = scmp.eq.s32.totalorder %s40, 1
      %p257 = por %p255, %p256
      %p258 = scmp.ne.s32.totalorder %s249, %s250
      %p259 = scmp.eq.s32.totalorder %s40, 0
      %p260 = por %p258, %p259
      %p261 = scmp.ne.s32.totalorder %s249, %s250
      %p262 = scmp.eq.s32.totalorder %s41, 1
      %p263 = por %p261, %p262
      %p265 = scmp.ne.s32.totalorder %s250, %s264
      %p266 = scmp.eq.s32.totalorder %s41, 0
      %p267 = por %p265, %p266
      %s269 = sadd.s32 %s268, 1
      %p272 = scmp.eq.s32.totalorder %s35, 1
      %p273 = scmp.ne.s32.totalorder %s268, %s270
      %p274 = scmp.eq.s32.totalorder %s35, 0
      %p275 = por %p273, %p274
      %p276 = scmp.ne.s32.totalorder %s268, %s270
      %p277 = scmp.eq.s32.totalorder %s40, 1
      %p278 = por %p276, %p277
      %p279 = scmp.ne.s32.totalorder %s270, %s271
      %p280 = scmp.eq.s32.totalorder %s40, 0
      %p281 = por %p279, %p280
      %p282 = scmp.ne.s32.totalorder %s270, %s271
      %p283 = scmp.eq.s32.totalorder %s41, 1
      %p284 = por %p282, %p283
      %p286 = scmp.ne.s32.totalorder %s271, %s285
      %p287 = scmp.eq.s32.totalorder %s41, 0
      %p288 = por %p286, %p287
      %s290 = sadd.s32 %s289, 1
      %p293 = scmp.eq.s32.totalorder %s35, 1
      %p294 = scmp.ne.s32.totalorder %s289, %s291
      %p295 = scmp.eq.s32.totalorder %s35, 0
      %p296 = por %p294, %p295
      %p297 = scmp.ne.s32.totalorder %s289, %s291
      %p298 = scmp.eq.s32.totalorder %s40, 1
      %p299 = por %p297, %p298
      %p300 = scmp.ne.s32.totalorder %s291, %s292
      %p301 = scmp.eq.s32.totalorder %s40, 0
      %p302 = por %p300, %p301
      %p303 = scmp.ne.s32.totalorder %s291, %s292
      %p304 = scmp.eq.s32.totalorder %s41, 1
      %p305 = por %p303, %p304
      %p307 = scmp.ne.s32.totalorder %s292, %s306
      %p308 = scmp.eq.s32.totalorder %s41, 0
      %p309 = por %p307, %p308
      %s311 = sadd.s32 %s310, 1
      %p314 = scmp.eq.s32.totalorder %s35, 1
      %p315 = scmp.ne.s32.totalorder %s310, %s312
      %p316 = scmp.eq.s32.totalorder %s35, 0
      %p317 = por %p315, %p316
      %p318 = scmp.ne.s32.totalorder %s310, %s312
      %p319 = scmp.eq.s32.totalorder %s40, 1
      %p320 = por %p318, %p319
      %p321 = scmp.ne.s32.totalorder %s312, %s313
      %p322 = scmp.eq.s32.totalorder %s40, 0
      %p323 = por %p321, %p322
      %p324 = scmp.ne.s32.totalorder %s312, %s313
      %p325 = scmp.eq.s32.totalorder %s41, 1
      %p326 = por %p324, %p325
      %p328 = scmp.ne.s32.totalorder %s313, %s327
      %p329 = scmp.eq.s32.totalorder %s41, 0
      %p330 = por %p328, %p329
      %s331 = ssub.s32 %s35, %s42
      %p332 = scmp.eq.s32.totalorder %s331, 0
      %s334 = sadd.s32 %s333, 1
      %s335 = scalar_select %p332, %s333, %s334
      %p338 = pneg %p332
      %p339 = scmp.eq.s32.totalorder %s35, 1
      %p340 = por %p338, %p339
      %p341 = scmp.ne.s32.totalorder %s333, %s336
      %p342 = scmp.eq.s32.totalorder %s35, 0
      %p343 = por %p341, %p342
      %p344 = scmp.ne.s32.totalorder %s333, %s336
      %p345 = scmp.eq.s32.totalorder %s40, 1
      %p346 = por %p344, %p345
      %p347 = scmp.ne.s32.totalorder %s336, %s337
      %p348 = scmp.eq.s32.totalorder %s40, 0
      %p349 = por %p347, %p348
      %p350 = scmp.ne.s32.totalorder %s336, %s337
      %p351 = scmp.eq.s32.totalorder %s41, 1
      %p352 = por %p350, %p351
      %p354 = scmp.ne.s32.totalorder %s337, %s353
      %p355 = scmp.eq.s32.totalorder %s41, 0
      %p356 = por %p354, %p355
      %s357 = ssub.s32 %s35, %s42
      %p358 = scmp.eq.s32.totalorder %s357, 0
      %s360 = sadd.s32 %s359, 1
      %s361 = scalar_select %p358, %s359, %s360
      %p364 = pneg %p358
      %p365 = scmp.eq.s32.totalorder %s35, 1
      %p366 = por %p364, %p365
      %p367 = scmp.ne.s32.totalorder %s359, %s362
      %p368 = scmp.eq.s32.totalorder %s35, 0
      %p369 = por %p367, %p368
      %p370 = scmp.ne.s32.totalorder %s359, %s362
      %p371 = scmp.eq.s32.totalorder %s40, 1
      %p372 = por %p370, %p371
      %p373 = scmp.ne.s32.totalorder %s362, %s363
      %p374 = scmp.eq.s32.totalorder %s40, 0
      %p375 = por %p373, %p374
      %p376 = scmp.ne.s32.totalorder %s362, %s363
      %p377 = scmp.eq.s32.totalorder %s41, 1
      %p378 = por %p376, %p377
      %p380 = scmp.ne.s32.totalorder %s363, %s379
      %p381 = scmp.eq.s32.totalorder %s41, 0
      %p382 = por %p380, %p381
      %p383 = scmp.le.s32.totalorder 1, %s35
      %p384 = scmp.lt.s32.totalorder %s35, 3
      %p385 = pnand %p383, %p384
      %p386 = pneg %p385
      // Predicated region
      $region9: #{tpu_custom_call.1} parent=5 // pred_check
        _
      $region10: #{tpu_custom_call.1} parent=5 // pred_check_branch
        %388 = sbr.rel (%p385) target = $region12
      $region11: #{tpu_custom_call.1} parent=5 // pred_region
        %s389 = ssub.s32 %s35, 1
        // Predicated region
        $region13: #{tpu_custom_call.1} parent=11 // pred_check
          %p390 = pneg %p134
        $region14: #{tpu_custom_call.1} parent=11 // pred_check_branch
          %392 = sbr.rel (%p390) target = $region16
        $region15: #{tpu_custom_call.1} parent=11 // pred_region
          %s394 = ssub.s32 512, 512
          %395 = vsyncadd [#allocation9], %s394
          %s396 = sshll.u32 [#allocation8], 4
          %s397 = int_to_ptr.vmem [resolvable:$true] %s396
          %402 = dma.hbm_to_vmem [thread:$0]  %s3, 512, %s397, [#allocation9], 128, 128, 8
        $region16: #{tpu_custom_call.1} parent=11 // pred_fallthru
          _
        // Predicated region
        $region17: #{tpu_custom_call.1} parent=11 // pred_check
          %p403 = pneg %p155
        $region18: #{tpu_custom_call.1} parent=11 // pred_check_branch
          %405 = sbr.rel (%p403) target = $region20
        $region19: #{tpu_custom_call.1} parent=11 // pred_region
          _
        $region20: #{tpu_custom_call.1} parent=11 // pred_fallthru
          _
        // Predicated region
        $region21: #{tpu_custom_call.1} parent=11 // pred_check
          %p406 = pneg %p176
        $region22: #{tpu_custom_call.1} parent=11 // pred_check_branch
          %408 = sbr.rel (%p406) target = $region24
        $region23: #{tpu_custom_call.1} parent=11 // pred_region
          %s410 = ssub.s32 512, 512
          %411 = vsyncadd [#allocation9], %s410
          %s412 = sshll.u32 [#allocation10], 4
          %s413 = int_to_ptr.vmem [resolvable:$true] %s412
          %418 = dma.hbm_to_vmem [thread:$0]  %s5, 512, %s413, [#allocation9], 128, 128, 8
        $region24: #{tpu_custom_call.1} parent=11 // pred_fallthru
          _
        // Predicated region
        $region25: #{tpu_custom_call.1} parent=11 // pred_check
          %p419 = pneg %p197
        $region26: #{tpu_custom_call.1} parent=11 // pred_check_branch
          %421 = sbr.rel (%p419) target = $region28
        $region27: #{tpu_custom_call.1} parent=11 // pred_region
          _
        $region28: #{tpu_custom_call.1} parent=11 // pred_fallthru
          _
        // Predicated region
        $region29: #{tpu_custom_call.1} parent=11 // pred_check
          %p422 = pneg %p218
        $region30: #{tpu_custom_call.1} parent=11 // pred_check_branch
          %424 = sbr.rel (%p422) target = $region32
        $region31: #{tpu_custom_call.1} parent=11 // pred_region
          %s426 = ssub.s32 512, 512
          %427 = vsyncadd [#allocation12], %s426
          %s428 = sshll.u32 [#allocation11], 4
          %s429 = int_to_ptr.vmem [resolvable:$true] %s428
          %434 = dma.hbm_to_vmem [thread:$0]  %s7, 512, %s429, [#allocation12], 128, 128, 8
        $region32: #{tpu_custom_call.1} parent=11 // pred_fallthru
          _
        // Predicated region
        $region33: #{tpu_custom_call.1} parent=11 // pred_check
          %p435 = pneg %p239
        $region34: #{tpu_custom_call.1} parent=11 // pred_check_branch
          %437 = sbr.rel (%p435) target = $region36
        $region35: #{tpu_custom_call.1} parent=11 // pred_region
          %s439 = ssub.s32 16, 16
          %440 = vsyncadd [#allocation12], %s439
          %s442 = sshll.u32 [#allocation13], 4
          %s443 = int_to_ptr.vmem [resolvable:$true] %s442
          %445 = dma.hbm_to_vmem [thread:$0]  %s8, 16, %s443, [#allocation12]
        $region36: #{tpu_custom_call.1} parent=11 // pred_fallthru
          _
        // Predicated region
        $region37: #{tpu_custom_call.1} parent=11 // pred_check
          %p446 = pneg %p260
        $region38: #{tpu_custom_call.1} parent=11 // pred_check_branch
          %448 = sbr.rel (%p446) target = $region40
        $region39: #{tpu_custom_call.1} parent=11 // pred_region
          _
        $region40: #{tpu_custom_call.1} parent=11 // pred_fallthru
          _
        // Predicated region
        $region41: #{tpu_custom_call.1} parent=11 // pred_check
          %p449 = pneg %p281
        $region42: #{tpu_custom_call.1} parent=11 // pred_check_branch
          %451 = sbr.rel (%p449) target = $region44
        $region43: #{tpu_custom_call.1} parent=11 // pred_region
          _
        $region44: #{tpu_custom_call.1} parent=11 // pred_fallthru
          _
        // Predicated region
        $region45: #{tpu_custom_call.1} parent=11 // pred_check
          %p452 = pneg %p302
        $region46: #{tpu_custom_call.1} parent=11 // pred_check_branch
          %454 = sbr.rel (%p452) target = $region48
        $region47: #{tpu_custom_call.1} parent=11 // pred_region
          _
        $region48: #{tpu_custom_call.1} parent=11 // pred_fallthru
          _
        // Predicated region
        $region49: #{tpu_custom_call.1} parent=11 // pred_check
          %p455 = pneg %p323
        $region50: #{tpu_custom_call.1} parent=11 // pred_check_branch
          %457 = sbr.rel (%p455) target = $region52
        $region51: #{tpu_custom_call.1} parent=11 // pred_region
          _
        $region52: #{tpu_custom_call.1} parent=11 // pred_fallthru
          _
      $region12: #{tpu_custom_call.1} parent=5 // pred_fallthru
        _
      %p458 = scmp.lt.s32.totalorder %s35, 2
      // Predicated region
      $region53: #{tpu_custom_call.1} parent=5 // pred_check
        %p459 = pneg %p458
      $region54: #{tpu_custom_call.1} parent=5 // pred_check_branch
        %461 = sbr.rel (%p459) target = $region56
      $region55: #{tpu_custom_call.1} parent=5 // pred_region
        // Predicated region
        $region57: #{tpu_custom_call.1} parent=55 // pred_check
          %p462 = pneg %p55
        $region58: #{tpu_custom_call.1} parent=55 // pred_check_branch
          %464 = sbr.rel (%p462) target = $region60
        $region59: #{tpu_custom_call.1} parent=55 // pred_region
          %s465 = sand.u32 %s45, 1
          %s466 = scalar_lea.sflag [#allocation3], %s465
          %s467 = sand.u32 %s45, 1
          %s468 = smul.addr %s467, 8
          %s469 = scalar_lea.vmem [#allocation2], %s468
          %s471 = ssub.s32 128, 128
          %472 = vsyncadd %s466, %s471
          %s473 = smul.addr %s35, 128
          %s474 = scalar_lea.hbm %s0, %s473
          %s476 = sshll.u32 %s469, 4
          %s477 = int_to_ptr.vmem [resolvable:$true] %s476
          %479 = dma.hbm_to_vmem [thread:$0]  %s474, 128, %s477, %s466
        $region60: #{tpu_custom_call.1} parent=55 // pred_fallthru
          _
        // Predicated region
        $region61: #{tpu_custom_call.1} parent=55 // pred_check
          %p480 = pneg %p81
        $region62: #{tpu_custom_call.1} parent=55 // pred_check_branch
          %482 = sbr.rel (%p480) target = $region64
        $region63: #{tpu_custom_call.1} parent=55 // pred_region
          %s483 = sand.u32 %s35, 1
          %s484 = scalar_lea.sflag [#allocation6], %s483
          %s485 = sand.u32 %s71, 1
          %s486 = smul.addr %s485, 8
          %s487 = scalar_lea.vmem [#allocation5], %s486
          %s489 = ssub.s32 128, 128
          %490 = vsyncadd %s484, %s489
          %s491 = smul.addr %s35, 128
          %s492 = scalar_lea.hbm %s1, %s491
          %s494 = sshll.u32 %s487, 4
          %s495 = int_to_ptr.vmem [resolvable:$true] %s494
          %497 = dma.hbm_to_vmem [thread:$0]  %s492, 128, %s495, %s484
        $region64: #{tpu_custom_call.1} parent=55 // pred_fallthru
          _
        // Predicated region
        $region65: #{tpu_custom_call.1} parent=55 // pred_check
          %p498 = pneg %p107
        $region66: #{tpu_custom_call.1} parent=55 // pred_check_branch
          %500 = sbr.rel (%p498) target = $region68
        $region67: #{tpu_custom_call.1} parent=55 // pred_region
          %s501 = sand.u32 %s35, 1
          %s502 = scalar_lea.sflag [#allocation6], %s501
          %s503 = sand.u32 %s97, 1
          %s504 = smul.addr %s503, 8
          %s505 = scalar_lea.vmem [#allocation7], %s504
          %s507 = ssub.s32 128, 128
          %508 = vsyncadd %s502, %s507
          %s509 = smul.addr %s35, 128
          %s510 = scalar_lea.hbm %s2, %s509
          %s512 = sshll.u32 %s505, 4
          %s513 = int_to_ptr.vmem [resolvable:$true] %s512
          %515 = dma.hbm_to_vmem [thread:$0]  %s510, 128, %s513, %s502
        $region68: #{tpu_custom_call.1} parent=55 // pred_fallthru
          _
      $region56: #{tpu_custom_call.1} parent=5 // pred_fallthru
        _
      %p516 = scmp.le.s32.totalorder 1, %s35
      %p517 = scmp.lt.s32.totalorder %s35, 3
      %p518 = pnand %p516, %p517
      %p519 = pneg %p518
      // Predicated region
      $region69: #{tpu_custom_call.1} parent=5 // pred_check
        _
      $region70: #{tpu_custom_call.1} parent=5 // pred_check_branch
        %521 = sbr.rel (%p518) target = $region72
      $region71: #{tpu_custom_call.1} parent=5 // pred_region
        %s522 = ssub.s32 %s35, 1
        %s523 = sand.u32 %s48, 1
        %s524 = scalar_lea.sflag [#allocation3], %s523
        %s525 = sand.u32 %s48, 1
        %s526 = smul.addr %s525, 8
        %s527 = scalar_lea.vmem [#allocation2], %s526
        // Predicated region
        $region73: #{tpu_custom_call.1} parent=71 // pred_check
          %p528 = pneg %p61
        $region74: #{tpu_custom_call.1} parent=71 // pred_check_branch
          %530 = sbr.rel (%p528) target = $region76
        $region75: #{tpu_custom_call.1} parent=71 // pred_region
          %531 = dma.done %s524, 128
        $region76: #{tpu_custom_call.1} parent=71 // pred_fallthru
          _
        %s532 = sand.u32 %s40, 1
        %s533 = scalar_lea.sflag [#allocation6], %s532
        %s534 = sand.u32 %s74, 1
        %s535 = smul.addr %s534, 8
        %s536 = scalar_lea.vmem [#allocation5], %s535
        // Predicated region
        $region77: #{tpu_custom_call.1} parent=71 // pred_check
          %p537 = pneg %p87
        $region78: #{tpu_custom_call.1} parent=71 // pred_check_branch
          %539 = sbr.rel (%p537) target = $region80
        $region79: #{tpu_custom_call.1} parent=71 // pred_region
          %540 = dma.done %s533, 128
        $region80: #{tpu_custom_call.1} parent=71 // pred_fallthru
          _
        %s541 = sand.u32 %s40, 1
        %s542 = scalar_lea.sflag [#allocation6], %s541
        %s543 = sand.u32 %s100, 1
        %s544 = smul.addr %s543, 8
        %s545 = scalar_lea.vmem [#allocation7], %s544
        // Predicated region
        $region81: #{tpu_custom_call.1} parent=71 // pred_check
          %p546 = pneg %p113
        $region82: #{tpu_custom_call.1} parent=71 // pred_check_branch
          %548 = sbr.rel (%p546) target = $region84
        $region83: #{tpu_custom_call.1} parent=71 // pred_region
          %549 = dma.done %s542, 128
        $region84: #{tpu_custom_call.1} parent=71 // pred_fallthru
          _
        // Predicated region
        $region85: #{tpu_custom_call.1} parent=71 // pred_check
          %p550 = pneg %p134
        $region86: #{tpu_custom_call.1} parent=71 // pred_check_branch
          %552 = sbr.rel (%p550) target = $region88
        $region87: #{tpu_custom_call.1} parent=71 // pred_region
          %553 = dma.done [#allocation9], 512
        $region88: #{tpu_custom_call.1} parent=71 // pred_fallthru
          _
        // Predicated region
        $region89: #{tpu_custom_call.1} parent=71 // pred_check
          %p554 = pneg %p176
        $region90: #{tpu_custom_call.1} parent=71 // pred_check_branch
          %556 = sbr.rel (%p554) target = $region92
        $region91: #{tpu_custom_call.1} parent=71 // pred_region
          %557 = dma.done [#allocation9], 512
        $region92: #{tpu_custom_call.1} parent=71 // pred_fallthru
          _
        // Predicated region
        $region93: #{tpu_custom_call.1} parent=71 // pred_check
          %p558 = pneg %p218
        $region94: #{tpu_custom_call.1} parent=71 // pred_check_branch
          %560 = sbr.rel (%p558) target = $region96
        $region95: #{tpu_custom_call.1} parent=71 // pred_region
          %561 = dma.done [#allocation12], 512
        $region96: #{tpu_custom_call.1} parent=71 // pred_fallthru
          _
        // Predicated region
        $region97: #{tpu_custom_call.1} parent=71 // pred_check
          %p562 = pneg %p239
        $region98: #{tpu_custom_call.1} parent=71 // pred_check_branch
          %564 = sbr.rel (%p562) target = $region100
        $region99: #{tpu_custom_call.1} parent=71 // pred_region
          %565 = dma.done [#allocation12], 16
        $region100: #{tpu_custom_call.1} parent=71 // pred_fallthru
          _
        %s566 = sand.u32 %s48, 1
        %s567 = scalar_lea.sflag [#allocation3], %s566
        %s568 = sand.u32 %s48, 1
        %s569 = smul.addr %s568, 8
        %s570 = scalar_lea.vmem [#allocation2], %s569
        %p571 = pneg %p61
        %p572 = pneg %p58
        %s573 = sand.u32 %s40, 1
        %s574 = scalar_lea.sflag [#allocation6], %s573
        %s575 = sand.u32 %s74, 1
        %s576 = smul.addr %s575, 8
        %s577 = scalar_lea.vmem [#allocation5], %s576
        %p578 = pneg %p87
        %p579 = pneg %p84
        %s580 = sand.u32 %s40, 1
        %s581 = scalar_lea.sflag [#allocation6], %s580
        %s582 = sand.u32 %s100, 1
        %s583 = smul.addr %s582, 8
        %s584 = scalar_lea.vmem [#allocation7], %s583
        %p585 = pneg %p113
        %p586 = pneg %p110
        %p587 = pneg %p134
        %p588 = pneg %p131
        %p589 = pneg %p155
        %p590 = pneg %p152
        %p591 = pneg %p176
        %p592 = pneg %p173
        %p593 = pneg %p197
        %p594 = pneg %p194
        %p595 = pneg %p218
        %p596 = pneg %p215
        %p597 = pneg %p239
        %p598 = pneg %p236
        %p599 = pneg %p260
        %p600 = pneg %p257
        %p601 = pneg %p281
        %p602 = pneg %p278
        %p603 = pneg %p302
        %p604 = pneg %p299
        %p605 = pneg %p323
        %p606 = pneg %p320
        %p607 = pneg %p349
        %p608 = pneg %p346
        %s609 = sand.u32 %s336, 1
        %s610 = scalar_lea.sflag [#allocation4], %s609
        %s611 = sand.u32 %s336, 1
        %s612 = smul.addr %s611, 8
        %s613 = scalar_lea.vmem [#allocation14], %s612
        %p614 = pneg %p375
        %p615 = pneg %p372
        %s616 = sand.u32 %s362, 1
        %s617 = scalar_lea.sflag [#allocation16], %s616
        %s618 = sand.u32 %s362, 1
        %s619 = smul.addr %s618, 32
        %s620 = scalar_lea.vmem [#allocation15], %s619
        %v621 = vld [vmem:[%s527] sm:$0xff]
        %v622 = vld [vmem:[%s536] sm:$0xff]
        %v623 = vld [vmem:[%s545] sm:$0xff]
        %v624 = vld [vmem:[#allocation8] sm:$0xff]
        %v625 = vld [vmem:[#allocation8 + $0x8] sm:$0xff]
        %v626 = vld [vmem:[#allocation8 + $0x10] sm:$0xff]
        %v627 = vld [vmem:[#allocation8 + $0x18] sm:$0xff]
        %v628 = vld [vmem:[%s4] sm:$0x1]
        %v630 = vlaneseq
        %v631 = vshrl.u32 %v630, 7
        %v632 = vsub.s32 0, %v631
        %v633 = vrot.slane %v628, %v632
        %vm635 = vcmask 261120
        %v637 = vsel %vm635, %v621, 0
        %639 = vmatprep.subr.mxu0 0.0
        %640 = vmatpush1.msra.mxu0 %v624
        %641 = vmatprep.subr.mxu0 0.0
        %642 = vmatpush1.msra.mxu0 %v625
        %643 = vmatprep.subr.mxu0 0.0
        %644 = vmatpush1.msra.mxu0 %v626
        %645 = vmatprep.subr.mxu0 0.0
        %646 = vmatpush1.msra.mxu0 %v627
        %647 = vmatprep.subr.mxu0 0.0
        %648 = vmatpush1.msra.mxu0 0.0
        %649 = vmatprep.subr.mxu0 0.0
        %650 = vmatpush1.msra.mxu0 0.0
        %651 = vmatprep.subr.mxu0 0.0
        %652 = vmatpush1.msra.mxu0 0.0
        %653 = vmatprep.subr.mxu0 0.0
        %654 = vmatpush1.msra.mxu0 0.0
        %655 = vmatprep.subr.mxu0 0.0
        %656 = vmatpush1.msra.mxu0 0.0
        %657 = vmatprep.subr.mxu0 0.0
        %658 = vmatpush1.msra.mxu0 0.0
        %659 = vmatprep.subr.mxu0 0.0
        %660 = vmatpush1.msra.mxu0 0.0
        %661 = vmatprep.subr.mxu0 0.0
        %662 = vmatpush1.msra.mxu0 0.0
        %663 = vmatprep.subr.mxu0 0.0
        %664 = vmatpush1.msra.mxu0 0.0
        %665 = vmatprep.subr.mxu0 0.0
        %666 = vmatpush1.msra.mxu0 0.0
        %667 = vmatprep.subr.mxu0 0.0
        %668 = vmatpush1.msra.mxu0 0.0
        %669 = vmatprep.subr.mxu0 0.0
        %670 = vmatpush1.msra.mxu0 0.0
        %671 = vmatprep.subr.mxu0 0.0
        %672 = vmatpush1.msra.mxu0 0.0
        %673 = vmatprep.subr.mxu0 0.0
        %674 = vmatpush1.msra.mxu0 0.0
        %675 = vmatprep.subr.mxu0 0.0
        %676 = vmatpush1.msra.mxu0 0.0
        %677 = vmatprep.subr.mxu0 0.0
        %678 = vmatpush1.msra.mxu0 0.0
        %679 = vmatprep.subr.mxu0 0.0
        %680 = vmatpush1.msra.mxu0 0.0
        %681 = vmatprep.subr.mxu0 0.0
        %682 = vmatpush1.msra.mxu0 0.0
        %683 = vmatprep.subr.mxu0 0.0
        %684 = vmatpush1.msra.mxu0 0.0
        %685 = vmatprep.subr.mxu0 0.0
        %686 = vmatpush1.msra.mxu0 0.0
        %687 = vmatprep.subr.mxu0 0.0
        %688 = vmatpush1.msra.mxu0 0.0
        %689 = vmatprep.subr.mxu0 0.0
        %690 = vmatpush1.msra.mxu0 0.0
        %691 = vmatprep.subr.mxu0 0.0
        %692 = vmatpush1.msra.mxu0 0.0
        %693 = vmatprep.subr.mxu0 0.0
        %694 = vmatpush1.msra.mxu0 0.0
        %695 = vmatprep.subr.mxu0 0.0
        %696 = vmatpush1.msra.mxu0 0.0
        %697 = vmatprep.subr.mxu0 0.0
        %698 = vmatpush1.msra.mxu0 0.0
        %699 = vmatprep.subr.mxu0 0.0
        %700 = vmatpush1.msra.mxu0 0.0
        %701 = vmatprep.subr.mxu0 0.0
        %702 = vmatpush1.msra.mxu0 0.0
        %703 = vmatprep.mubr.f32.mxu0 0.0
        %704 = vmatmul.mubr.f32.gmra.mrb[0].mxu0 %v637
        %v705 = vpop.f32.mrb[0].mxu0
        %v706 = vadd.f32 %v633, %v705
        %v707 = vpop.f32.mrb[0].mxu0
        %708 = vdwg.mxu0
        %v709 = vld [vmem:[#allocation10] sm:$0xff]
        %v710 = vld [vmem:[#allocation10 + $0x8] sm:$0xff]
        %v711 = vld [vmem:[#allocation10 + $0x10] sm:$0xff]
        %v712 = vld [vmem:[#allocation10 + $0x18] sm:$0xff]
        %v713 = vld [vmem:[%s6] sm:$0x1]
        %v715 = vlaneseq
        %v716 = vshrl.u32 %v715, 7
        %v717 = vsub.s32 0, %v716
        %v718 = vrot.slane %v713, %v717
        %v721 = vsel %vm635, %v622, 0
        %723 = vmatprep.subr.mxu0 0.0
        %724 = vmatpush1.msra.mxu0 %v709
        %725 = vmatprep.subr.mxu0 0.0
        %726 = vmatpush1.msra.mxu0 %v710
        %727 = vmatprep.subr.mxu0 0.0
        %728 = vmatpush1.msra.mxu0 %v711
        %729 = vmatprep.subr.mxu0 0.0
        %730 = vmatpush1.msra.mxu0 %v712
        %731 = vmatprep.subr.mxu0 0.0
        %732 = vmatpush1.msra.mxu0 0.0
        %733 = vmatprep.subr.mxu0 0.0
        %734 = vmatpush1.msra.mxu0 0.0
        %735 = vmatprep.subr.mxu0 0.0
        %736 = vmatpush1.msra.mxu0 0.0
        %737 = vmatprep.subr.mxu0 0.0
        %738 = vmatpush1.msra.mxu0 0.0
        %739 = vmatprep.subr.mxu0 0.0
        %740 = vmatpush1.msra.mxu0 0.0
        %741 = vmatprep.subr.mxu0 0.0
        %742 = vmatpush1.msra.mxu0 0.0
        %743 = vmatprep.subr.mxu0 0.0
        %744 = vmatpush1.msra.mxu0 0.0
        %745 = vmatprep.subr.mxu0 0.0
        %746 = vmatpush1.msra.mxu0 0.0
        %747 = vmatprep.subr.mxu0 0.0
        %748 = vmatpush1.msra.mxu0 0.0
        %749 = vmatprep.subr.mxu0 0.0
        %750 = vmatpush1.msra.mxu0 0.0
        %751 = vmatprep.subr.mxu0 0.0
        %752 = vmatpush1.msra.mxu0 0.0
        %753 = vmatprep.subr.mxu0 0.0
        %754 = vmatpush1.msra.mxu0 0.0
        %755 = vmatprep.subr.mxu0 0.0
        %756 = vmatpush1.msra.mxu0 0.0
        %757 = vmatprep.subr.mxu0 0.0
        %758 = vmatpush1.msra.mxu0 0.0
        %759 = vmatprep.subr.mxu0 0.0
        %760 = vmatpush1.msra.mxu0 0.0
        %761 = vmatprep.subr.mxu0 0.0
        %762 = vmatpush1.msra.mxu0 0.0
        %763 = vmatprep.subr.mxu0 0.0
        %764 = vmatpush1.msra.mxu0 0.0
        %765 = vmatprep.subr.mxu0 0.0
        %766 = vmatpush1.msra.mxu0 0.0
        %767 = vmatprep.subr.mxu0 0.0
        %768 = vmatpush1.msra.mxu0 0.0
        %769 = vmatprep.subr.mxu0 0.0
        %770 = vmatpush1.msra.mxu0 0.0
        %771 = vmatprep.subr.mxu0 0.0
        %772 = vmatpush1.msra.mxu0 0.0
        %773 = vmatprep.subr.mxu0 0.0
        %774 = vmatpush1.msra.mxu0 0.0
        %775 = vmatprep.subr.mxu0 0.0
        %776 = vmatpush1.msra.mxu0 0.0
        %777 = vmatprep.subr.mxu0 0.0
        %778 = vmatpush1.msra.mxu0 0.0
        %779 = vmatprep.subr.mxu0 0.0
        %780 = vmatpush1.msra.mxu0 0.0
        %781 = vmatprep.subr.mxu0 0.0
        %782 = vmatpush1.msra.mxu0 0.0
        %783 = vmatprep.subr.mxu0 0.0
        %784 = vmatpush1.msra.mxu0 0.0
        %785 = vmatprep.subr.mxu0 0.0
        %786 = vmatpush1.msra.mxu0 0.0
        %787 = vmatprep.mubr.f32.mxu0 0.0
        %788 = vmatmul.mubr.f32.gmra.mrb[0].mxu0 %v721
        %v789 = vpop.f32.mrb[0].mxu0
        %v790 = vadd.f32 %v718, %v789
        %v791 = vpop.f32.mrb[0].mxu0
        %792 = vdwg.mxu0
        %v793 = vld [vmem:[#allocation11] sm:$0xff]
        %v794 = vld [vmem:[#allocation11 + $0x8] sm:$0xff]
        %v795 = vld [vmem:[#allocation11 + $0x10] sm:$0xff]
        %v796 = vld [vmem:[#allocation11 + $0x18] sm:$0xff]
        %v797 = vld [vmem:[#allocation13] sm:$0x1]
        %v799 = vlaneseq
        %v800 = vshrl.u32 %v799, 7
        %v801 = vsub.s32 0, %v800
        %v802 = vrot.slane %v797, %v801
        %v805 = vsel %vm635, %v623, 0
        %807 = vmatprep.subr.mxu0 0.0
        %808 = vmatpush1.msra.mxu0 %v793
        %809 = vmatprep.subr.mxu0 0.0
        %810 = vmatpush1.msra.mxu0 %v794
        %811 = vmatprep.subr.mxu0 0.0
        %812 = vmatpush1.msra.mxu0 %v795
        %813 = vmatprep.subr.mxu0 0.0
        %814 = vmatpush1.msra.mxu0 %v796
        %815 = vmatprep.subr.mxu0 0.0
        %816 = vmatpush1.msra.mxu0 0.0
        %817 = vmatprep.subr.mxu0 0.0
        %818 = vmatpush1.msra.mxu0 0.0
        %819 = vmatprep.subr.mxu0 0.0
        %820 = vmatpush1.msra.mxu0 0.0
        %821 = vmatprep.subr.mxu0 0.0
        %822 = vmatpush1.msra.mxu0 0.0
        %823 = vmatprep.subr.mxu0 0.0
        %824 = vmatpush1.msra.mxu0 0.0
        %825 = vmatprep.subr.mxu0 0.0
        %826 = vmatpush1.msra.mxu0 0.0
        %827 = vmatprep.subr.mxu0 0.0
        %828 = vmatpush1.msra.mxu0 0.0
        %829 = vmatprep.subr.mxu0 0.0
        %830 = vmatpush1.msra.mxu0 0.0
        %831 = vmatprep.subr.mxu0 0.0
        %832 = vmatpush1.msra.mxu0 0.0
        %833 = vmatprep.subr.mxu0 0.0
        %834 = vmatpush1.msra.mxu0 0.0
        %835 = vmatprep.subr.mxu0 0.0
        %836 = vmatpush1.msra.mxu0 0.0
        %837 = vmatprep.subr.mxu0 0.0
        %838 = vmatpush1.msra.mxu0 0.0
        %839 = vmatprep.subr.mxu0 0.0
        %840 = vmatpush1.msra.mxu0 0.0
        %841 = vmatprep.subr.mxu0 0.0
        %842 = vmatpush1.msra.mxu0 0.0
        %843 = vmatprep.subr.mxu0 0.0
        %844 = vmatpush1.msra.mxu0 0.0
        %845 = vmatprep.subr.mxu0 0.0
        %846 = vmatpush1.msra.mxu0 0.0
        %847 = vmatprep.subr.mxu0 0.0
        %848 = vmatpush1.msra.mxu0 0.0
        %849 = vmatprep.subr.mxu0 0.0
        %850 = vmatpush1.msra.mxu0 0.0
        %851 = vmatprep.subr.mxu0 0.0
        %852 = vmatpush1.msra.mxu0 0.0
        %853 = vmatprep.subr.mxu0 0.0
        %854 = vmatpush1.msra.mxu0 0.0
        %855 = vmatprep.subr.mxu0 0.0
        %856 = vmatpush1.msra.mxu0 0.0
        %857 = vmatprep.subr.mxu0 0.0
        %858 = vmatpush1.msra.mxu0 0.0
        %859 = vmatprep.subr.mxu0 0.0
        %860 = vmatpush1.msra.mxu0 0.0
        %861 = vmatprep.subr.mxu0 0.0
        %862 = vmatpush1.msra.mxu0 0.0
        %863 = vmatprep.subr.mxu0 0.0
        %864 = vmatpush1.msra.mxu0 0.0
        %865 = vmatprep.subr.mxu0 0.0
        %866 = vmatpush1.msra.mxu0 0.0
        %867 = vmatprep.subr.mxu0 0.0
        %868 = vmatpush1.msra.mxu0 0.0
        %869 = vmatprep.subr.mxu0 0.0
        %870 = vmatpush1.msra.mxu0 0.0
        %871 = vmatprep.mubr.f32.mxu0 0.0
        %872 = vmatmul.mubr.f32.gmra.mrb[0].mxu0 %v805
        %v873 = vpop.f32.mrb[0].mxu0
        %v874 = vadd.f32 %v802, %v873
        %v875 = vpop.f32.mrb[0].mxu0
        %876 = vdwg.mxu0
        %v877 = vmul.f32 %v706, 0.35355338
        %vm878 = vcmask 64512
        %v880 = vsel %vm878, %v877, 0
        %v883 = vsel %vm878, %v790, 0
        %885 = vmatprep.subr.mxu0 0.0
        %886 = vmatpush1.xpose.msra.mxu0 %v883
        %887 = vmatprep.subr.mxu0 0.0
        %888 = vmatpush1.xpose.msra.mxu0 0.0
        %889 = vmatprep.subr.mxu0 0.0
        %890 = vmatpush1.xpose.msra.mxu0 0.0
        %891 = vmatprep.subr.mxu0 0.0
        %892 = vmatpush1.xpose.msra.mxu0 0.0
        %893 = vmatprep.subr.mxu0 0.0
        %894 = vmatpush1.xpose.msra.mxu0 0.0
        %895 = vmatprep.subr.mxu0 0.0
        %896 = vmatpush1.xpose.msra.mxu0 0.0
        %897 = vmatprep.subr.mxu0 0.0
        %898 = vmatpush1.xpose.msra.mxu0 0.0
        %899 = vmatprep.subr.mxu0 0.0
        %900 = vmatpush1.xpose.msra.mxu0 0.0
        %901 = vmatprep.subr.mxu0 0.0
        %902 = vmatpush1.xpose.msra.mxu0 0.0
        %903 = vmatprep.subr.mxu0 0.0
        %904 = vmatpush1.xpose.msra.mxu0 0.0
        %905 = vmatprep.subr.mxu0 0.0
        %906 = vmatpush1.xpose.msra.mxu0 0.0
        %907 = vmatprep.subr.mxu0 0.0
        %908 = vmatpush1.xpose.msra.mxu0 0.0
        %909 = vmatprep.subr.mxu0 0.0
        %910 = vmatpush1.xpose.msra.mxu0 0.0
        %911 = vmatprep.subr.mxu0 0.0
        %912 = vmatpush1.xpose.msra.mxu0 0.0
        %913 = vmatprep.subr.mxu0 0.0
        %914 = vmatpush1.xpose.msra.mxu0 0.0
        %915 = vmatprep.subr.mxu0 0.0
        %916 = vmatpush1.xpose.msra.mxu0 0.0
        %917 = vmatprep.subr.mxu0 0.0
        %918 = vmatpush1.xpose.msra.mxu0 0.0
        %919 = vmatprep.subr.mxu0 0.0
        %920 = vmatpush1.xpose.msra.mxu0 0.0
        %921 = vmatprep.subr.mxu0 0.0
        %922 = vmatpush1.xpose.msra.mxu0 0.0
        %923 = vmatprep.subr.mxu0 0.0
        %924 = vmatpush1.xpose.msra.mxu0 0.0
        %925 = vmatprep.subr.mxu0 0.0
        %926 = vmatpush1.xpose.msra.mxu0 0.0
        %927 = vmatprep.subr.mxu0 0.0
        %928 = vmatpush1.xpose.msra.mxu0 0.0
        %929 = vmatprep.subr.mxu0 0.0
        %930 = vmatpush1.xpose.msra.mxu0 0.0
        %931 = vmatprep.subr.mxu0 0.0
        %932 = vmatpush1.xpose.msra.mxu0 0.0
        %933 = vmatprep.subr.mxu0 0.0
        %934 = vmatpush1.xpose.msra.mxu0 0.0
        %935 = vmatprep.subr.mxu0 0.0
        %936 = vmatpush1.xpose.msra.mxu0 0.0
        %937 = vmatprep.subr.mxu0 0.0
        %938 = vmatpush1.xpose.msra.mxu0 0.0
        %939 = vmatprep.subr.mxu0 0.0
        %940 = vmatpush1.xpose.msra.mxu0 0.0
        %941 = vmatprep.subr.mxu0 0.0
        %942 = vmatpush1.xpose.msra.mxu0 0.0
        %943 = vmatprep.subr.mxu0 0.0
        %944 = vmatpush1.xpose.msra.mxu0 0.0
        %945 = vmatprep.subr.mxu0 0.0
        %946 = vmatpush1.xpose.msra.mxu0 0.0
        %947 = vmatprep.subr.mxu0 0.0
        %948 = vmatpush1.xpose.msra.mxu0 0.0
        %949 = vmatprep.mubr.f32.mxu0 0.0
        %950 = vmatmul.mubr.f32.gmra.mrb[0].mxu0 %v880
        %v951 = vpop.f32.mrb[0].mxu0
        %v952 = vadd.f32 0.0, %v951
        %v953 = vpop.f32.mrb[0].mxu0
        %954 = vdwg.mxu0
        %v955 = vsel %vm878, %v952, -inf
        %956 = vmax.xlane.f32.xlu0 %v955
        %v957 = vpop.xlane.xlu0 %956
        %v958 = vsub.f32 %v952, %v957
        %v959 = vmul.f32 %v958, 1.442695
        %v960 = vpow.pop %v959
        %v961 = vsel %vm878, %v960, 0.0
        %962 = vadd.xlane.f32.xlu0 %v961
        %v963 = vpop.xlane.xlu0 %962
        %v964 = vrcp.pop %v963
        %v965 = vmul.f32 %v960, %v964
        %966 = vst.msk [vmem:[%s620] sm:$0xff] %vm878, %v965
        %v968 = vsel %vm878, %v965, 0
        %970 = vmatprep.subr.mxu0 0.0
        %971 = vmatpush1.msra.mxu0 %v874
        %972 = vmatprep.subr.mxu0 0.0
        %973 = vmatpush1.msra.mxu0 0.0
        %974 = vmatprep.subr.mxu0 0.0
        %975 = vmatpush1.msra.mxu0 0.0
        %976 = vmatprep.subr.mxu0 0.0
        %977 = vmatpush1.msra.mxu0 0.0
        %978 = vmatprep.subr.mxu0 0.0
        %979 = vmatpush1.msra.mxu0 0.0
        %980 = vmatprep.subr.mxu0 0.0
        %981 = vmatpush1.msra.mxu0 0.0
        %982 = vmatprep.subr.mxu0 0.0
        %983 = vmatpush1.msra.mxu0 0.0
        %984 = vmatprep.subr.mxu0 0.0
        %985 = vmatpush1.msra.mxu0 0.0
        %986 = vmatprep.subr.mxu0 0.0
        %987 = vmatpush1.msra.mxu0 0.0
        %988 = vmatprep.subr.mxu0 0.0
        %989 = vmatpush1.msra.mxu0 0.0
        %990 = vmatprep.subr.mxu0 0.0
        %991 = vmatpush1.msra.mxu0 0.0
        %992 = vmatprep.subr.mxu0 0.0
        %993 = vmatpush1.msra.mxu0 0.0
        %994 = vmatprep.subr.mxu0 0.0
        %995 = vmatpush1.msra.mxu0 0.0
        %996 = vmatprep.subr.mxu0 0.0
        %997 = vmatpush1.msra.mxu0 0.0
        %998 = vmatprep.subr.mxu0 0.0
        %999 = vmatpush1.msra.mxu0 0.0
        %1000 = vmatprep.subr.mxu0 0.0
        %1001 = vmatpush1.msra.mxu0 0.0
        %1002 = vmatprep.subr.mxu0 0.0
        %1003 = vmatpush1.msra.mxu0 0.0
        %1004 = vmatprep.subr.mxu0 0.0
        %1005 = vmatpush1.msra.mxu0 0.0
        %1006 = vmatprep.subr.mxu0 0.0
        %1007 = vmatpush1.msra.mxu0 0.0
        %1008 = vmatprep.subr.mxu0 0.0
        %1009 = vmatpush1.msra.mxu0 0.0
        %1010 = vmatprep.subr.mxu0 0.0
        %1011 = vmatpush1.msra.mxu0 0.0
        %1012 = vmatprep.subr.mxu0 0.0
        %1013 = vmatpush1.msra.mxu0 0.0
        %1014 = vmatprep.subr.mxu0 0.0
        %1015 = vmatpush1.msra.mxu0 0.0
        %1016 = vmatprep.subr.mxu0 0.0
        %1017 = vmatpush1.msra.mxu0 0.0
        %1018 = vmatprep.subr.mxu0 0.0
        %1019 = vmatpush1.msra.mxu0 0.0
        %1020 = vmatprep.subr.mxu0 0.0
        %1021 = vmatpush1.msra.mxu0 0.0
        %1022 = vmatprep.subr.mxu0 0.0
        %1023 = vmatpush1.msra.mxu0 0.0
        %1024 = vmatprep.subr.mxu0 0.0
        %1025 = vmatpush1.msra.mxu0 0.0
        %1026 = vmatprep.subr.mxu0 0.0
        %1027 = vmatpush1.msra.mxu0 0.0
        %1028 = vmatprep.subr.mxu0 0.0
        %1029 = vmatpush1.msra.mxu0 0.0
        %1030 = vmatprep.subr.mxu0 0.0
        %1031 = vmatpush1.msra.mxu0 0.0
        %1032 = vmatprep.subr.mxu0 0.0
        %1033 = vmatpush1.msra.mxu0 0.0
        %1034 = vmatprep.mubr.f32.mxu0 0.0
        %1035 = vmatmul.mubr.f32.gmra.mrb[0].mxu0 %v968
        %v1036 = vpop.f32.mrb[0].mxu0
        %v1037 = vadd.f32 0.0, %v1036
        %v1038 = vpop.f32.mrb[0].mxu0
        %1039 = vdwg.mxu0
        %1040 = vrot.lane.b32.xlu0 %v877, 120
        %v1041 = vpop.permute.xlu0 %1040
        %1042 = vrot.lane.b32.xlu0 %v790, 120
        %v1043 = vpop.permute.xlu0 %1042
        %v1044 = vsel %vm878, %v1041, 0
        %v1046 = vsel %vm878, %v1043, 0
        %1048 = vmatprep.subr.mxu0 0.0
        %1049 = vmatpush1.xpose.msra.mxu0 %v1046
        %1050 = vmatprep.subr.mxu0 0.0
        %1051 = vmatpush1.xpose.msra.mxu0 0.0
        %1052 = vmatprep.subr.mxu0 0.0
        %1053 = vmatpush1.xpose.msra.mxu0 0.0
        %1054 = vmatprep.subr.mxu0 0.0
        %1055 = vmatpush1.xpose.msra.mxu0 0.0
        %1056 = vmatprep.subr.mxu0 0.0
        %1057 = vmatpush1.xpose.msra.mxu0 0.0
        %1058 = vmatprep.subr.mxu0 0.0
        %1059 = vmatpush1.xpose.msra.mxu0 0.0
        %1060 = vmatprep.subr.mxu0 0.0
        %1061 = vmatpush1.xpose.msra.mxu0 0.0
        %1062 = vmatprep.subr.mxu0 0.0
        %1063 = vmatpush1.xpose.msra.mxu0 0.0
        %1064 = vmatprep.subr.mxu0 0.0
        %1065 = vmatpush1.xpose.msra.mxu0 0.0
        %1066 = vmatprep.subr.mxu0 0.0
        %1067 = vmatpush1.xpose.msra.mxu0 0.0
        %1068 = vmatprep.subr.mxu0 0.0
        %1069 = vmatpush1.xpose.msra.mxu0 0.0
        %1070 = vmatprep.subr.mxu0 0.0
        %1071 = vmatpush1.xpose.msra.mxu0 0.0
        %1072 = vmatprep.subr.mxu0 0.0
        %1073 = vmatpush1.xpose.msra.mxu0 0.0
        %1074 = vmatprep.subr.mxu0 0.0
        %1075 = vmatpush1.xpose.msra.mxu0 0.0
        %1076 = vmatprep.subr.mxu0 0.0
        %1077 = vmatpush1.xpose.msra.mxu0 0.0
        %1078 = vmatprep.subr.mxu0 0.0
        %1079 = vmatpush1.xpose.msra.mxu0 0.0
        %1080 = vmatprep.subr.mxu0 0.0
        %1081 = vmatpush1.xpose.msra.mxu0 0.0
        %1082 = vmatprep.subr.mxu0 0.0
        %1083 = vmatpush1.xpose.msra.mxu0 0.0
        %1084 = vmatprep.subr.mxu0 0.0
        %1085 = vmatpush1.xpose.msra.mxu0 0.0
        %1086 = vmatprep.subr.mxu0 0.0
        %1087 = vmatpush1.xpose.msra.mxu0 0.0
        %1088 = vmatprep.subr.mxu0 0.0
        %1089 = vmatpush1.xpose.msra.mxu0 0.0
        %1090 = vmatprep.subr.mxu0 0.0
        %1091 = vmatpush1.xpose.msra.mxu0 0.0
        %1092 = vmatprep.subr.mxu0 0.0
        %1093 = vmatpush1.xpose.msra.mxu0 0.0
        %1094 = vmatprep.subr.mxu0 0.0
        %1095 = vmatpush1.xpose.msra.mxu0 0.0
        %1096 = vmatprep.subr.mxu0 0.0
        %1097 = vmatpush1.xpose.msra.mxu0 0.0
        %1098 = vmatprep.subr.mxu0 0.0
        %1099 = vmatpush1.xpose.msra.mxu0 0.0
        %1100 = vmatprep.subr.mxu0 0.0
        %1101 = vmatpush1.xpose.msra.mxu0 0.0
        %1102 = vmatprep.subr.mxu0 0.0
        %1103 = vmatpush1.xpose.msra.mxu0 0.0
        %1104 = vmatprep.subr.mxu0 0.0
        %1105 = vmatpush1.xpose.msra.mxu0 0.0
        %1106 = vmatprep.subr.mxu0 0.0
        %1107 = vmatpush1.xpose.msra.mxu0 0.0
        %1108 = vmatprep.subr.mxu0 0.0
        %1109 = vmatpush1.xpose.msra.mxu0 0.0
        %1110 = vmatprep.subr.mxu0 0.0
        %1111 = vmatpush1.xpose.msra.mxu0 0.0
        %1112 = vmatprep.mubr.f32.mxu0 0.0
        %1113 = vmatmul.mubr.f32.gmra.mrb[0].mxu0 %v1044
        %v1114 = vpop.f32.mrb[0].mxu0
        %v1115 = vadd.f32 0.0, %v1114
        %v1116 = vpop.f32.mrb[0].mxu0
        %1117 = vdwg.mxu0
        %v1118 = vsel %vm878, %v1115, -inf
        %1119 = vmax.xlane.f32.xlu0 %v1118
        %v1120 = vpop.xlane.xlu0 %1119
        %v1121 = vsub.f32 %v1115, %v1120
        %v1122 = vmul.f32 %v1121, 1.442695
        %v1123 = vpow.pop %v1122
        %v1124 = vsel %vm878, %v1123, 0.0
        %1125 = vadd.xlane.f32.xlu0 %v1124
        %v1126 = vpop.xlane.xlu0 %1125
        %v1127 = vrcp.pop %v1126
        %v1128 = vmul.f32 %v1123, %v1127
        %s1129 = scalar_lea.vmem %s620, 8 [#allocation15]
        %1130 = vst.msk [vmem:[%s1129] sm:$0xff] %vm878, %v1128
        %1132 = vrot.lane.b32.xlu0 %v874, 120
        %v1133 = vpop.permute.xlu0 %1132
        %v1136 = vsel %vm878, %v1128, 0
        %1138 = vmatprep.subr.mxu0 0.0
        %1139 = vmatpush1.msra.mxu0 %v1133
        %1140 = vmatprep.subr.mxu0 0.0
        %1141 = vmatpush1.msra.mxu0 0.0
        %1142 = vmatprep.subr.mxu0 0.0
        %1143 = vmatpush1.msra.mxu0 0.0
        %1144 = vmatprep.subr.mxu0 0.0
        %1145 = vmatpush1.msra.mxu0 0.0
        %1146 = vmatprep.subr.mxu0 0.0
        %1147 = vmatpush1.msra.mxu0 0.0
        %1148 = vmatprep.subr.mxu0 0.0
        %1149 = vmatpush1.msra.mxu0 0.0
        %1150 = vmatprep.subr.mxu0 0.0
        %1151 = vmatpush1.msra.mxu0 0.0
        %1152 = vmatprep.subr.mxu0 0.0
        %1153 = vmatpush1.msra.mxu0 0.0
        %1154 = vmatprep.subr.mxu0 0.0
        %1155 = vmatpush1.msra.mxu0 0.0
        %1156 = vmatprep.subr.mxu0 0.0
        %1157 = vmatpush1.msra.mxu0 0.0
        %1158 = vmatprep.subr.mxu0 0.0
        %1159 = vmatpush1.msra.mxu0 0.0
        %1160 = vmatprep.subr.mxu0 0.0
        %1161 = vmatpush1.msra.mxu0 0.0
        %1162 = vmatprep.subr.mxu0 0.0
        %1163 = vmatpush1.msra.mxu0 0.0
        %1164 = vmatprep.subr.mxu0 0.0
        %1165 = vmatpush1.msra.mxu0 0.0
        %1166 = vmatprep.subr.mxu0 0.0
        %1167 = vmatpush1.msra.mxu0 0.0
        %1168 = vmatprep.subr.mxu0 0.0
        %1169 = vmatpush1.msra.mxu0 0.0
        %1170 = vmatprep.subr.mxu0 0.0
        %1171 = vmatpush1.msra.mxu0 0.0
        %1172 = vmatprep.subr.mxu0 0.0
        %1173 = vmatpush1.msra.mxu0 0.0
        %1174 = vmatprep.subr.mxu0 0.0
        %1175 = vmatpush1.msra.mxu0 0.0
        %1176 = vmatprep.subr.mxu0 0.0
        %1177 = vmatpush1.msra.mxu0 0.0
        %1178 = vmatprep.subr.mxu0 0.0
        %1179 = vmatpush1.msra.mxu0 0.0
        %1180 = vmatprep.subr.mxu0 0.0
        %1181 = vmatpush1.msra.mxu0 0.0
        %1182 = vmatprep.subr.mxu0 0.0
        %1183 = vmatpush1.msra.mxu0 0.0
        %1184 = vmatprep.subr.mxu0 0.0
        %1185 = vmatpush1.msra.mxu0 0.0
        %1186 = vmatprep.subr.mxu0 0.0
        %1187 = vmatpush1.msra.mxu0 0.0
        %1188 = vmatprep.subr.mxu0 0.0
        %1189 = vmatpush1.msra.mxu0 0.0
        %1190 = vmatprep.subr.mxu0 0.0
        %1191 = vmatpush1.msra.mxu0 0.0
        %1192 = vmatprep.subr.mxu0 0.0
        %1193 = vmatpush1.msra.mxu0 0.0
        %1194 = vmatprep.subr.mxu0 0.0
        %1195 = vmatpush1.msra.mxu0 0.0
        %1196 = vmatprep.subr.mxu0 0.0
        %1197 = vmatpush1.msra.mxu0 0.0
        %1198 = vmatprep.subr.mxu0 0.0
        %1199 = vmatpush1.msra.mxu0 0.0
        %1200 = vmatprep.subr.mxu0 0.0
        %1201 = vmatpush1.msra.mxu0 0.0
        %1202 = vmatprep.mubr.f32.mxu0 0.0
        %1203 = vmatmul.mubr.f32.gmra.mrb[0].mxu0 %v1136
        %v1204 = vpop.f32.mrb[0].mxu0
        %v1205 = vadd.f32 0.0, %v1204
        %v1206 = vpop.f32.mrb[0].mxu0
        %1207 = vdwg.mxu0
        %1208 = vrot.lane.b32.xlu0 %v877, 112
        %v1209 = vpop.permute.xlu0 %1208
        %1210 = vrot.lane.b32.xlu0 %v790, 112
        %v1211 = vpop.permute.xlu0 %1210
        %v1212 = vsel %vm878, %v1209, 0
        %v1214 = vsel %vm878, %v1211, 0
        %1216 = vmatprep.subr.mxu0 0.0
        %1217 = vmatpush1.xpose.msra.mxu0 %v1214
        %1218 = vmatprep.subr.mxu0 0.0
        %1219 = vmatpush1.xpose.msra.mxu0 0.0
        %1220 = vmatprep.subr.mxu0 0.0
        %1221 = vmatpush1.xpose.msra.mxu0 0.0
        %1222 = vmatprep.subr.mxu0 0.0
        %1223 = vmatpush1.xpose.msra.mxu0 0.0
        %1224 = vmatprep.subr.mxu0 0.0
        %1225 = vmatpush1.xpose.msra.mxu0 0.0
        %1226 = vmatprep.subr.mxu0 0.0
        %1227 = vmatpush1.xpose.msra.mxu0 0.0
        %1228 = vmatprep.subr.mxu0 0.0
        %1229 = vmatpush1.xpose.msra.mxu0 0.0
        %1230 = vmatprep.subr.mxu0 0.0
        %1231 = vmatpush1.xpose.msra.mxu0 0.0
        %1232 = vmatprep.subr.mxu0 0.0
        %1233 = vmatpush1.xpose.msra.mxu0 0.0
        %1234 = vmatprep.subr.mxu0 0.0
        %1235 = vmatpush1.xpose.msra.mxu0 0.0
        %1236 = vmatprep.subr.mxu0 0.0
        %1237 = vmatpush1.xpose.msra.mxu0 0.0
        %1238 = vmatprep.subr.mxu0 0.0
        %1239 = vmatpush1.xpose.msra.mxu0 0.0
        %1240 = vmatprep.subr.mxu0 0.0
        %1241 = vmatpush1.xpose.msra.mxu0 0.0
        %1242 = vmatprep.subr.mxu0 0.0
        %1243 = vmatpush1.xpose.msra.mxu0 0.0
        %1244 = vmatprep.subr.mxu0 0.0
        %1245 = vmatpush1.xpose.msra.mxu0 0.0
        %1246 = vmatprep.subr.mxu0 0.0
        %1247 = vmatpush1.xpose.msra.mxu0 0.0
        %1248 = vmatprep.subr.mxu0 0.0
        %1249 = vmatpush1.xpose.msra.mxu0 0.0
        %1250 = vmatprep.subr.mxu0 0.0
        %1251 = vmatpush1.xpose.msra.mxu0 0.0
        %1252 = vmatprep.subr.mxu0 0.0
        %1253 = vmatpush1.xpose.msra.mxu0 0.0
        %1254 = vmatprep.subr.mxu0 0.0
        %1255 = vmatpush1.xpose.msra.mxu0 0.0
        %1256 = vmatprep.subr.mxu0 0.0
        %1257 = vmatpush1.xpose.msra.mxu0 0.0
        %1258 = vmatprep.subr.mxu0 0.0
        %1259 = vmatpush1.xpose.msra.mxu0 0.0
        %1260 = vmatprep.subr.mxu0 0.0
        %1261 = vmatpush1.xpose.msra.mxu0 0.0
        %1262 = vmatprep.subr.mxu0 0.0
        %1263 = vmatpush1.xpose.msra.mxu0 0.0
        %1264 = vmatprep.subr.mxu0 0.0
        %1265 = vmatpush1.xpose.msra.mxu0 0.0
        %1266 = vmatprep.subr.mxu0 0.0
        %1267 = vmatpush1.xpose.msra.mxu0 0.0
        %1268 = vmatprep.subr.mxu0 0.0
        %1269 = vmatpush1.xpose.msra.mxu0 0.0
        %1270 = vmatprep.subr.mxu0 0.0
        %1271 = vmatpush1.xpose.msra.mxu0 0.0
        %1272 = vmatprep.subr.mxu0 0.0
        %1273 = vmatpush1.xpose.msra.mxu0 0.0
        %1274 = vmatprep.subr.mxu0 0.0
        %1275 = vmatpush1.xpose.msra.mxu0 0.0
        %1276 = vmatprep.subr.mxu0 0.0
        %1277 = vmatpush1.xpose.msra.mxu0 0.0
        %1278 = vmatprep.subr.mxu0 0.0
        %1279 = vmatpush1.xpose.msra.mxu0 0.0
        %1280 = vmatprep.mubr.f32.mxu0 0.0
        %1281 = vmatmul.mubr.f32.gmra.mrb[0].mxu0 %v1212
        %v1282 = vpop.f32.mrb[0].mxu0
        %v1283 = vadd.f32 0.0, %v1282
        %v1284 = vpop.f32.mrb[0].mxu0
        %1285 = vdwg.mxu0
        %v1286 = vsel %vm878, %v1283, -inf
        %1287 = vmax.xlane.f32.xlu0 %v1286
        %v1288 = vpop.xlane.xlu0 %1287
        %v1289 = vsub.f32 %v1283, %v1288
        %v1290 = vmul.f32 %v1289, 1.442695
        %v1291 = vpow.pop %v1290
        %v1292 = vsel %vm878, %v1291, 0.0
        %1293 = vadd.xlane.f32.xlu0 %v1292
        %v1294 = vpop.xlane.xlu0 %1293
        %v1295 = vrcp.pop %v1294
        %v1296 = vmul.f32 %v1291, %v1295
        %s1297 = scalar_lea.vmem %s620, 16 [#allocation15]
        %1298 = vst.msk [vmem:[%s1297] sm:$0xff] %vm878, %v1296
        %1299 = vrot.lane.b32.xlu0 %v874, 112
        %v1300 = vpop.permute.xlu0 %1299
        %v1303 = vsel %vm878, %v1296, 0
        %1305 = vmatprep.subr.mxu0 0.0
        %1306 = vmatpush1.msra.mxu0 %v1300
        %1307 = vmatprep.subr.mxu0 0.0
        %1308 = vmatpush1.msra.mxu0 0.0
        %1309 = vmatprep.subr.mxu0 0.0
        %1310 = vmatpush1.msra.mxu0 0.0
        %1311 = vmatprep.subr.mxu0 0.0
        %1312 = vmatpush1.msra.mxu0 0.0
        %1313 = vmatprep.subr.mxu0 0.0
        %1314 = vmatpush1.msra.mxu0 0.0
        %1315 = vmatprep.subr.mxu0 0.0
        %1316 = vmatpush1.msra.mxu0 0.0
        %1317 = vmatprep.subr.mxu0 0.0
        %1318 = vmatpush1.msra.mxu0 0.0
        %1319 = vmatprep.subr.mxu0 0.0
        %1320 = vmatpush1.msra.mxu0 0.0
        %1321 = vmatprep.subr.mxu0 0.0
        %1322 = vmatpush1.msra.mxu0 0.0
        %1323 = vmatprep.subr.mxu0 0.0
        %1324 = vmatpush1.msra.mxu0 0.0
        %1325 = vmatprep.subr.mxu0 0.0
        %1326 = vmatpush1.msra.mxu0 0.0
        %1327 = vmatprep.subr.mxu0 0.0
        %1328 = vmatpush1.msra.mxu0 0.0
        %1329 = vmatprep.subr.mxu0 0.0
        %1330 = vmatpush1.msra.mxu0 0.0
        %1331 = vmatprep.subr.mxu0 0.0
        %1332 = vmatpush1.msra.mxu0 0.0
        %1333 = vmatprep.subr.mxu0 0.0
        %1334 = vmatpush1.msra.mxu0 0.0
        %1335 = vmatprep.subr.mxu0 0.0
        %1336 = vmatpush1.msra.mxu0 0.0
        %1337 = vmatprep.subr.mxu0 0.0
        %1338 = vmatpush1.msra.mxu0 0.0
        %1339 = vmatprep.subr.mxu0 0.0
        %1340 = vmatpush1.msra.mxu0 0.0
        %1341 = vmatprep.subr.mxu0 0.0
        %1342 = vmatpush1.msra.mxu0 0.0
        %1343 = vmatprep.subr.mxu0 0.0
        %1344 = vmatpush1.msra.mxu0 0.0
        %1345 = vmatprep.subr.mxu0 0.0
        %1346 = vmatpush1.msra.mxu0 0.0
        %1347 = vmatprep.subr.mxu0 0.0
        %1348 = vmatpush1.msra.mxu0 0.0
        %1349 = vmatprep.subr.mxu0 0.0
        %1350 = vmatpush1.msra.mxu0 0.0
        %1351 = vmatprep.subr.mxu0 0.0
        %1352 = vmatpush1.msra.mxu0 0.0
        %1353 = vmatprep.subr.mxu0 0.0
        %1354 = vmatpush1.msra.mxu0 0.0
        %1355 = vmatprep.subr.mxu0 0.0
        %1356 = vmatpush1.msra.mxu0 0.0
        %1357 = vmatprep.subr.mxu0 0.0
        %1358 = vmatpush1.msra.mxu0 0.0
        %1359 = vmatprep.subr.mxu0 0.0
        %1360 = vmatpush1.msra.mxu0 0.0
        %1361 = vmatprep.subr.mxu0 0.0
        %1362 = vmatpush1.msra.mxu0 0.0
        %1363 = vmatprep.subr.mxu0 0.0
        %1364 = vmatpush1.msra.mxu0 0.0
        %1365 = vmatprep.subr.mxu0 0.0
        %1366 = vmatpush1.msra.mxu0 0.0
        %1367 = vmatprep.subr.mxu0 0.0
        %1368 = vmatpush1.msra.mxu0 0.0
        %1369 = vmatprep.mubr.f32.mxu0 0.0
        %1370 = vmatmul.mubr.f32.gmra.mrb[0].mxu0 %v1303
        %v1371 = vpop.f32.mrb[0].mxu0
        %v1372 = vadd.f32 0.0, %v1371
        %v1373 = vpop.f32.mrb[0].mxu0
        %1374 = vdwg.mxu0
        %1375 = vrot.lane.b32.xlu0 %v877, 104
        %v1376 = vpop.permute.xlu0 %1375
        %1377 = vrot.lane.b32.xlu0 %v790, 104
        %v1378 = vpop.permute.xlu0 %1377
        %v1379 = vsel %vm878, %v1376, 0
        %v1381 = vsel %vm878, %v1378, 0
        %1383 = vmatprep.subr.mxu0 0.0
        %1384 = vmatpush1.xpose.msra.mxu0 %v1381
        %1385 = vmatprep.subr.mxu0 0.0
        %1386 = vmatpush1.xpose.msra.mxu0 0.0
        %1387 = vmatprep.subr.mxu0 0.0
        %1388 = vmatpush1.xpose.msra.mxu0 0.0
        %1389 = vmatprep.subr.mxu0 0.0
        %1390 = vmatpush1.xpose.msra.mxu0 0.0
        %1391 = vmatprep.subr.mxu0 0.0
        %1392 = vmatpush1.xpose.msra.mxu0 0.0
        %1393 = vmatprep.subr.mxu0 0.0
        %1394 = vmatpush1.xpose.msra.mxu0 0.0
        %1395 = vmatprep.subr.mxu0 0.0
        %1396 = vmatpush1.xpose.msra.mxu0 0.0
        %1397 = vmatprep.subr.mxu0 0.0
        %1398 = vmatpush1.xpose.msra.mxu0 0.0
        %1399 = vmatprep.subr.mxu0 0.0
        %1400 = vmatpush1.xpose.msra.mxu0 0.0
        %1401 = vmatprep.subr.mxu0 0.0
        %1402 = vmatpush1.xpose.msra.mxu0 0.0
        %1403 = vmatprep.subr.mxu0 0.0
        %1404 = vmatpush1.xpose.msra.mxu0 0.0
        %1405 = vmatprep.subr.mxu0 0.0
        %1406 = vmatpush1.xpose.msra.mxu0 0.0
        %1407 = vmatprep.subr.mxu0 0.0
        %1408 = vmatpush1.xpose.msra.mxu0 0.0
        %1409 = vmatprep.subr.mxu0 0.0
        %1410 = vmatpush1.xpose.msra.mxu0 0.0
        %1411 = vmatprep.subr.mxu0 0.0
        %1412 = vmatpush1.xpose.msra.mxu0 0.0
        %1413 = vmatprep.subr.mxu0 0.0
        %1414 = vmatpush1.xpose.msra.mxu0 0.0
        %1415 = vmatprep.subr.mxu0 0.0
        %1416 = vmatpush1.xpose.msra.mxu0 0.0
        %1417 = vmatprep.subr.mxu0 0.0
        %1418 = vmatpush1.xpose.msra.mxu0 0.0
        %1419 = vmatprep.subr.mxu0 0.0
        %1420 = vmatpush1.xpose.msra.mxu0 0.0
        %1421 = vmatprep.subr.mxu0 0.0
        %1422 = vmatpush1.xpose.msra.mxu0 0.0
        %1423 = vmatprep.subr.mxu0 0.0
        %1424 = vmatpush1.xpose.msra.mxu0 0.0
        %1425 = vmatprep.subr.mxu0 0.0
        %1426 = vmatpush1.xpose.msra.mxu0 0.0
        %1427 = vmatprep.subr.mxu0 0.0
        %1428 = vmatpush1.xpose.msra.mxu0 0.0
        %1429 = vmatprep.subr.mxu0 0.0
        %1430 = vmatpush1.xpose.msra.mxu0 0.0
        %1431 = vmatprep.subr.mxu0 0.0
        %1432 = vmatpush1.xpose.msra.mxu0 0.0
        %1433 = vmatprep.subr.mxu0 0.0
        %1434 = vmatpush1.xpose.msra.mxu0 0.0
        %1435 = vmatprep.subr.mxu0 0.0
        %1436 = vmatpush1.xpose.msra.mxu0 0.0
        %1437 = vmatprep.subr.mxu0 0.0
        %1438 = vmatpush1.xpose.msra.mxu0 0.0
        %1439 = vmatprep.subr.mxu0 0.0
        %1440 = vmatpush1.xpose.msra.mxu0 0.0
        %1441 = vmatprep.subr.mxu0 0.0
        %1442 = vmatpush1.xpose.msra.mxu0 0.0
        %1443 = vmatprep.subr.mxu0 0.0
        %1444 = vmatpush1.xpose.msra.mxu0 0.0
        %1445 = vmatprep.subr.mxu0 0.0
        %1446 = vmatpush1.xpose.msra.mxu0 0.0
        %1447 = vmatprep.mubr.f32.mxu0 0.0
        %1448 = vmatmul.mubr.f32.gmra.mrb[0].mxu0 %v1379
        %v1449 = vpop.f32.mrb[0].mxu0
        %v1450 = vadd.f32 0.0, %v1449
        %v1451 = vpop.f32.mrb[0].mxu0
        %1452 = vdwg.mxu0
        %v1453 = vsel %vm878, %v1450, -inf
        %1454 = vmax.xlane.f32.xlu0 %v1453
        %v1455 = vpop.xlane.xlu0 %1454
        %v1456 = vsub.f32 %v1450, %v1455
        %v1457 = vmul.f32 %v1456, 1.442695
        %v1458 = vpow.pop %v1457
        %v1459 = vsel %vm878, %v1458, 0.0
        %1460 = vadd.xlane.f32.xlu0 %v1459
        %v1461 = vpop.xlane.xlu0 %1460
        %v1462 = vrcp.pop %v1461
        %v1463 = vmul.f32 %v1458, %v1462
        %s1464 = scalar_lea.vmem %s620, 24 [#allocation15]
        %1465 = vst.msk [vmem:[%s1464] sm:$0xff] %vm878, %v1463
        %1466 = vrot.lane.b32.xlu0 %v874, 104
        %v1467 = vpop.permute.xlu0 %1466
        %v1470 = vsel %vm878, %v1463, 0
        %1472 = vmatprep.subr.mxu0 0.0
        %1473 = vmatpush1.msra.mxu0 %v1467
        %1474 = vmatprep.subr.mxu0 0.0
        %1475 = vmatpush1.msra.mxu0 0.0
        %1476 = vmatprep.subr.mxu0 0.0
        %1477 = vmatpush1.msra.mxu0 0.0
        %1478 = vmatprep.subr.mxu0 0.0
        %1479 = vmatpush1.msra.mxu0 0.0
        %1480 = vmatprep.subr.mxu0 0.0
        %1481 = vmatpush1.msra.mxu0 0.0
        %1482 = vmatprep.subr.mxu0 0.0
        %1483 = vmatpush1.msra.mxu0 0.0
        %1484 = vmatprep.subr.mxu0 0.0
        %1485 = vmatpush1.msra.mxu0 0.0
        %1486 = vmatprep.subr.mxu0 0.0
        %1487 = vmatpush1.msra.mxu0 0.0
        %1488 = vmatprep.subr.mxu0 0.0
        %1489 = vmatpush1.msra.mxu0 0.0
        %1490 = vmatprep.subr.mxu0 0.0
        %1491 = vmatpush1.msra.mxu0 0.0
        %1492 = vmatprep.subr.mxu0 0.0
        %1493 = vmatpush1.msra.mxu0 0.0
        %1494 = vmatprep.subr.mxu0 0.0
        %1495 = vmatpush1.msra.mxu0 0.0
        %1496 = vmatprep.subr.mxu0 0.0
        %1497 = vmatpush1.msra.mxu0 0.0
        %1498 = vmatprep.subr.mxu0 0.0
        %1499 = vmatpush1.msra.mxu0 0.0
        %1500 = vmatprep.subr.mxu0 0.0
        %1501 = vmatpush1.msra.mxu0 0.0
        %1502 = vmatprep.subr.mxu0 0.0
        %1503 = vmatpush1.msra.mxu0 0.0
        %1504 = vmatprep.subr.mxu0 0.0
        %1505 = vmatpush1.msra.mxu0 0.0
        %1506 = vmatprep.subr.mxu0 0.0
        %1507 = vmatpush1.msra.mxu0 0.0
        %1508 = vmatprep.subr.mxu0 0.0
        %1509 = vmatpush1.msra.mxu0 0.0
        %1510 = vmatprep.subr.mxu0 0.0
        %1511 = vmatpush1.msra.mxu0 0.0
        %1512 = vmatprep.subr.mxu0 0.0
        %1513 = vmatpush1.msra.mxu0 0.0
        %1514 = vmatprep.subr.mxu0 0.0
        %1515 = vmatpush1.msra.mxu0 0.0
        %1516 = vmatprep.subr.mxu0 0.0
        %1517 = vmatpush1.msra.mxu0 0.0
        %1518 = vmatprep.subr.mxu0 0.0
        %1519 = vmatpush1.msra.mxu0 0.0
        %1520 = vmatprep.subr.mxu0 0.0
        %1521 = vmatpush1.msra.mxu0 0.0
        %1522 = vmatprep.subr.mxu0 0.0
        %1523 = vmatpush1.msra.mxu0 0.0
        %1524 = vmatprep.subr.mxu0 0.0
        %1525 = vmatpush1.msra.mxu0 0.0
        %1526 = vmatprep.subr.mxu0 0.0
        %1527 = vmatpush1.msra.mxu0 0.0
        %1528 = vmatprep.subr.mxu0 0.0
        %1529 = vmatpush1.msra.mxu0 0.0
        %1530 = vmatprep.subr.mxu0 0.0
        %1531 = vmatpush1.msra.mxu0 0.0
        %1532 = vmatprep.subr.mxu0 0.0
        %1533 = vmatpush1.msra.mxu0 0.0
        %1534 = vmatprep.subr.mxu0 0.0
        %1535 = vmatpush1.msra.mxu0 0.0
        %1536 = vmatprep.mubr.f32.mxu0 0.0
        %1537 = vmatmul.mubr.f32.gmra.mrb[0].mxu0 %v1470
        %v1538 = vpop.f32.mrb[0].mxu0
        %v1539 = vadd.f32 0.0, %v1538
        %v1540 = vpop.f32.mrb[0].mxu0
        %1541 = vdwg.mxu0
        %1543 = vrot.lane.b32.xlu0 %v1205, 8
        %v1544 = vpop.permute.xlu0 %1543
        %1547 = vrot.lane.b32.xlu0 %v1372, 16
        %v1548 = vpop.permute.xlu0 %1547
        %1551 = vrot.lane.b32.xlu0 %v1539, 24
        %v1552 = vpop.permute.xlu0 %1551
        %v1554 = vsel %vm878, %v1037, %v1544
        %vm1555 = vcmask 130048
        %v1556 = vsel %vm1555, %v1554, %v1548
        %vm1557 = vcmask 195584
        %v1558 = vsel %vm1557, %v1556, %v1552
        %v1559 = vld [vmem:[%s9] sm:$0xff]
        %v1560 = vld [vmem:[%s9 + $0x8] sm:$0xff]
        %v1561 = vld [vmem:[%s9 + $0x10] sm:$0xff]
        %v1562 = vld [vmem:[%s9 + $0x18] sm:$0xff]
        %v1563 = vld [vmem:[%s10] sm:$0x1]
        %v1565 = vlaneseq
        %v1566 = vshrl.u32 %v1565, 7
        %v1567 = vsub.s32 0, %v1566
        %v1568 = vrot.slane %v1563, %v1567
        %v1571 = vsel %vm635, %v1558, 0
        %1573 = vmatprep.subr.mxu0 0.0
        %1574 = vmatpush1.msra.mxu0 %v1559
        %1575 = vmatprep.subr.mxu0 0.0
        %1576 = vmatpush1.msra.mxu0 %v1560
        %1577 = vmatprep.subr.mxu0 0.0
        %1578 = vmatpush1.msra.mxu0 %v1561
        %1579 = vmatprep.subr.mxu0 0.0
        %1580 = vmatpush1.msra.mxu0 %v1562
        %1581 = vmatprep.subr.mxu0 0.0
        %1582 = vmatpush1.msra.mxu0 0.0
        %1583 = vmatprep.subr.mxu0 0.0
        %1584 = vmatpush1.msra.mxu0 0.0
        %1585 = vmatprep.subr.mxu0 0.0
        %1586 = vmatpush1.msra.mxu0 0.0
        %1587 = vmatprep.subr.mxu0 0.0
        %1588 = vmatpush1.msra.mxu0 0.0
        %1589 = vmatprep.subr.mxu0 0.0
        %1590 = vmatpush1.msra.mxu0 0.0
        %1591 = vmatprep.subr.mxu0 0.0
        %1592 = vmatpush1.msra.mxu0 0.0
        %1593 = vmatprep.subr.mxu0 0.0
        %1594 = vmatpush1.msra.mxu0 0.0
        %1595 = vmatprep.subr.mxu0 0.0
        %1596 = vmatpush1.msra.mxu0 0.0
        %1597 = vmatprep.subr.mxu0 0.0
        %1598 = vmatpush1.msra.mxu0 0.0
        %1599 = vmatprep.subr.mxu0 0.0
        %1600 = vmatpush1.msra.mxu0 0.0
        %1601 = vmatprep.subr.mxu0 0.0
        %1602 = vmatpush1.msra.mxu0 0.0
        %1603 = vmatprep.subr.mxu0 0.0
        %1604 = vmatpush1.msra.mxu0 0.0
        %1605 = vmatprep.subr.mxu0 0.0
        %1606 = vmatpush1.msra.mxu0 0.0
        %1607 = vmatprep.subr.mxu0 0.0
        %1608 = vmatpush1.msra.mxu0 0.0
        %1609 = vmatprep.subr.mxu0 0.0
        %1610 = vmatpush1.msra.mxu0 0.0
        %1611 = vmatprep.subr.mxu0 0.0
        %1612 = vmatpush1.msra.mxu0 0.0
        %1613 = vmatprep.subr.mxu0 0.0
        %1614 = vmatpush1.msra.mxu0 0.0
        %1615 = vmatprep.subr.mxu0 0.0
        %1616 = vmatpush1.msra.mxu0 0.0
        %1617 = vmatprep.subr.mxu0 0.0
        %1618 = vmatpush1.msra.mxu0 0.0
        %1619 = vmatprep.subr.mxu0 0.0
        %1620 = vmatpush1.msra.mxu0 0.0
        %1621 = vmatprep.subr.mxu0 0.0
        %1622 = vmatpush1.msra.mxu0 0.0
        %1623 = vmatprep.subr.mxu0 0.0
        %1624 = vmatpush1.msra.mxu0 0.0
        %1625 = vmatprep.subr.mxu0 0.0
        %1626 = vmatpush1.msra.mxu0 0.0
        %1627 = vmatprep.subr.mxu0 0.0
        %1628 = vmatpush1.msra.mxu0 0.0
        %1629 = vmatprep.subr.mxu0 0.0
        %1630 = vmatpush1.msra.mxu0 0.0
        %1631 = vmatprep.subr.mxu0 0.0
        %1632 = vmatpush1.msra.mxu0 0.0
        %1633 = vmatprep.subr.mxu0 0.0
        %1634 = vmatpush1.msra.mxu0 0.0
        %1635 = vmatprep.subr.mxu0 0.0
        %1636 = vmatpush1.msra.mxu0 0.0
        %1637 = vmatprep.mubr.f32.mxu0 0.0
        %1638 = vmatmul.mubr.f32.gmra.mrb[0].mxu0 %v1571
        %v1639 = vpop.f32.mrb[0].mxu0
        %v1640 = vadd.f32 %v1568, %v1639
        %v1641 = vpop.f32.mrb[0].mxu0
        %1642 = vdwg.mxu0
        %v1643 = vadd.f32 %v1640, %v621
        %v1644 = vsel %vm635, %v1643, 0.0
        %1645 = vadd.xlane.f32.xlu0 %v1644
        %v1646 = vpop.xlane.xlu0 %1645
        %v1647 = vrcp.pop 32.0
        %v1648 = vmul.f32 %v1646, %v1647
        %v1649 = vsub.f32 %v1643, %v1648
        %v1650 = vmul.f32 %v1649, %v1649
        %v1651 = vsel %vm635, %v1650, 0.0
        %1652 = vadd.xlane.f32.xlu0 %v1651
        %v1653 = vpop.xlane.xlu0 %1652
        %v1654 = vmul.f32 %v1653, %v1647
        %v1655 = vadd.f32 %v1654, 1e-05
        %v1656 = vrsqrt.pop %v1655
        %v1657 = vmul.f32 %v1649, %v1656
        %v1658 = vld [vmem:[%s11] sm:$0x1]
        %v1660 = vlaneseq
        %v1661 = vshrl.u32 %v1660, 7
        %v1662 = vsub.s32 0, %v1661
        %v1663 = vrot.slane %v1658, %v1662
        %v1665 = vmul.f32 %v1657, %v1663
        %v1666 = vld [vmem:[%s12] sm:$0x1]
        %v1668 = vlaneseq
        %v1669 = vshrl.u32 %v1668, 7
        %v1670 = vsub.s32 0, %v1669
        %v1671 = vrot.slane %v1666, %v1670
        %v1673 = vadd.f32 %v1665, %v1671
        %1674 = vst.msk [vmem:[%s613] sm:$0xff] %vm635, %v1673
        %s1675 = sand.u32 %s336, 1
        %s1676 = scalar_lea.sflag [#allocation4], %s1675
        %s1677 = sand.u32 %s336, 1
        %s1678 = smul.addr %s1677, 8
        %s1679 = scalar_lea.vmem [#allocation14], %s1678
        %s1680 = sand.u32 %s362, 1
        %s1681 = scalar_lea.sflag [#allocation16], %s1680
        %s1682 = sand.u32 %s362, 1
        %s1683 = smul.addr %s1682, 32
        %s1684 = scalar_lea.vmem [#allocation15], %s1683
        // Predicated region
        $region101: #{tpu_custom_call.1} parent=71 // pred_check
          %p1685 = pneg %p346
        $region102: #{tpu_custom_call.1} parent=71 // pred_check_branch
          %1687 = sbr.rel (%p1685) target = $region104
        $region103: #{tpu_custom_call.1} parent=71 // pred_region
          %s1689 = ssub.s32 128, 128
          %1690 = vsyncadd %s1676, %s1689
          %s1691 = smul.addr %s40, 128
          %s1692 = scalar_lea.hbm %s13, %s1691
          %s1694 = sshll.u32 %s1679, 4
          %s1695 = int_to_ptr.vmem [resolvable:$true] %s1694
          %1697 = dma.vmem_to_hbm [thread:$0]  %s1695, 128, %s1692, %s1676
        $region104: #{tpu_custom_call.1} parent=71 // pred_fallthru
          _
        // Predicated region
        $region105: #{tpu_custom_call.1} parent=71 // pred_check
          %p1698 = pneg %p372
        $region106: #{tpu_custom_call.1} parent=71 // pred_check_branch
          %1700 = sbr.rel (%p1698) target = $region108
        $region107: #{tpu_custom_call.1} parent=71 // pred_region
          %s1702 = ssub.s32 512, 512
          %1703 = vsyncadd %s1681, %s1702
          %s1704 = smul.addr %s40, 128
          %s1705 = scalar_lea.hbm %s14, %s1704
          %s1706 = sshll.u32 %s1684, 4
          %s1707 = int_to_ptr.vmem [resolvable:$true] %s1706
          %1712 = dma.vmem_to_hbm [thread:$0]  %s1707, 512, %s1705, %s1681, 128, 256, 8
        $region108: #{tpu_custom_call.1} parent=71 // pred_fallthru
          _
      $region72: #{tpu_custom_call.1} parent=5 // pred_fallthru
        _
      %p1713 = scmp.le.s32.totalorder 2, %s35
      // Predicated region
      $region109: #{tpu_custom_call.1} parent=5 // pred_check
        %p1714 = pneg %p1713
      $region110: #{tpu_custom_call.1} parent=5 // pred_check_branch
        %1716 = sbr.rel (%p1714) target = $region112
      $region111: #{tpu_custom_call.1} parent=5 // pred_region
        %s1717 = ssub.s32 %s35, 2
        // Predicated region
        $region113: #{tpu_custom_call.1} parent=111 // pred_check
          %p1718 = pneg %p352
        $region114: #{tpu_custom_call.1} parent=111 // pred_check_branch
          %1720 = sbr.rel (%p1718) target = $region116
        $region115: #{tpu_custom_call.1} parent=111 // pred_region
          %s1721 = sand.u32 %s337, 1
          %s1722 = scalar_lea.sflag [#allocation4], %s1721
          %s1723 = sand.u32 %s337, 1
          %s1724 = smul.addr %s1723, 8
          %s1725 = scalar_lea.vmem [#allocation14], %s1724
          %1726 = dma.done %s1722, 128
        $region116: #{tpu_custom_call.1} parent=111 // pred_fallthru
          _
        // Predicated region
        $region117: #{tpu_custom_call.1} parent=111 // pred_check
          %p1727 = pneg %p378
        $region118: #{tpu_custom_call.1} parent=111 // pred_check_branch
          %1729 = sbr.rel (%p1727) target = $region120
        $region119: #{tpu_custom_call.1} parent=111 // pred_region
          %s1730 = sand.u32 %s363, 1
          %s1731 = scalar_lea.sflag [#allocation16], %s1730
          %s1732 = sand.u32 %s363, 1
          %s1733 = smul.addr %s1732, 32
          %s1734 = scalar_lea.vmem [#allocation15], %s1733
          %1735 = dma.done %s1731, 512
        $region120: #{tpu_custom_call.1} parent=111 // pred_fallthru
          _
      $region112: #{tpu_custom_call.1} parent=5 // pred_fallthru
        _
    $region6: #{tpu_custom_call.1} parent=1 // loop_footer
      %s39 = sadd.s32 1, %s35
    $region7: #{tpu_custom_call.1} parent=1 // loop_footer_branch
      %34 = sbr.rel target = $region3
    $region8: #{tpu_custom_call.1} parent=1 // loop_exit
      _
    %1736 = vsyncpa [#allocation3], 1
    %s1737 = scalar_lea.sflag [#allocation3], 1
    %1738 = vsyncpa %s1737, 1
    %1739 = vsyncpa [#allocation6], 1
    %s1740 = scalar_lea.sflag [#allocation6], 1
    %1741 = vsyncpa %s1740, 1
    %1742 = vsyncpa [#allocation9], 1
    %1743 = vsyncpa [#allocation12], 1
    %1744 = vsyncpa [#allocation4], 1
    %s1745 = scalar_lea.sflag [#allocation4], 1
    %1746 = vsyncpa %s1745, 1
    %1747 = vsyncpa [#allocation16], 1
    %s1748 = scalar_lea.sflag [#allocation16], 1
    %1749 = vsyncpa %s1748, 1

</llo_original>
